<compile_context>
chip_gen: v5e
topology: v5e:2x2
jax: 0.10.0
libtpu: 0.0.40
codegen_flags: <defaults>
</compile_context>

<pallas_src>
import jax
import jax.numpy as jnp
import numpy as np
from jax.experimental import pallas as pl
from jax.experimental.pallas import tpu as pltpu

_LANE = 128
_SUBLANE = 8


def _round_up(x, m):
    return (x + m - 1) // m * m


# ----------------------------------------------------------------------------
# Fused Pallas kernel: conv1 GEMM + in-VMEM conv2 patch gather (selection
# matmuls) + conv2 GEMM.  All shapes are 128-lane padded.
# ----------------------------------------------------------------------------
def _fused_encoder_kernel(p1_ref, w1_ref, b1_ref, s_ref, w2_ref, b2_ref, o_ref):
    # conv1:  [M1P, K1P] @ [K1P, C1P] + bias  -> intermediate h stays on-chip.
    h = jnp.dot(p1_ref[...], w1_ref[...],
                preferred_element_type=jnp.float32) + b1_ref[...]

    # conv2: sum over the KH*KW kernel offsets.  For offset t,
    #   s_ref[t]  [M2P, M1P] is a 0/1 row-selection matrix implementing the
    #             stride-2 / pad-1 patch gather (all-zero rows give the conv's
    #             zero padding for free),
    #   w2_ref[t] [C1P, OC2P] is that offset's weight slice.
    acc = jnp.zeros(o_ref.shape, jnp.float32)
    for t in range(s_ref.shape[0]):          # static 4*4 = 16 iterations
        gathered = jnp.dot(s_ref[t], h, preferred_element_type=jnp.float32)
        acc = acc + jnp.dot(gathered, w2_ref[t],
                            preferred_element_type=jnp.float32)
    o_ref[...] = acc + b2_ref[...]


# ----------------------------------------------------------------------------
# One-time packing of weights / gather matrices + jitted forward closure
# ----------------------------------------------------------------------------
def make_img_encoder(params, x_shape, stride=2, pad=1):
    w1, b1, w2, b2 = params
    N, C, H, W = x_shape
    OC1, IC1, KH, KW = w1.shape          # (12, 3, 4, 4)
    OC2, IC2, KH2, KW2 = w2.shape        # (24, 12, 4, 4)
    assert C == IC1 and OC1 == IC2

    OH1 = (H + 2 * pad - KH) // stride + 1
    OW1 = (W + 2 * pad - KW) // stride + 1
    OH2 = (OH1 + 2 * pad - KH2) // stride + 1
    OW2 = (OW1 + 2 * pad - KW2) // stride + 1

    K1 = IC1 * KH * KW                   # 48
    M1 = N * OH1 * OW1                   # 128 for (2,3,16,16)
    M2 = N * OH2 * OW2                   # 32
    K1P = _round_up(K1, _LANE)           # 128
    C1P = _round_up(OC1, _LANE)          # 128 (conv1 out chans == conv2 in chans)
    OC2P = _round_up(OC2, _LANE)         # 128
    M1P = _round_up(M1, _SUBLANE)
    M2P = _round_up(M2, _SUBLANE)

    # --- pack weights once (hoisted out of the forward path) -----------------
    w1_mat = np.zeros((K1P, C1P), np.float32)
    w1_mat[:K1, :OC1] = np.asarray(w1).reshape(OC1, K1).T
    b1_row = np.zeros((1, C1P), np.float32)
    b1_row[0, :OC1] = np.asarray(b1)

    w2_off = np.zeros((KH2 * KW2, C1P, OC2P), np.float32)
    w2_np = np.asarray(w2)
    for i in range(KH2):
        for j in range(KW2):
            w2_off[i * KW2 + j, :IC2, :OC2] = w2_np[:, :, i, j].T
    b2_row = np.zeros((1, OC2P), np.float32)
    b2_row[0, :OC2] = np.asarray(b2)

    # --- 0/1 gather matrices for the in-kernel conv2 patch extraction --------
    sel = np.zeros((KH2 * KW2, M2P, M1P), np.float32)
    for n in range(N):
        for oh in range(OH2):
            for ow in range(OW2):
                m2 = (n * OH2 + oh) * OW2 + ow
                for i in range(KH2):
                    for j in range(KW2):
                        ih = stride * oh - pad + i
                        iw = stride * ow - pad + j
                        if 0 <= ih < OH1 and 0 <= iw < OW1:
                            m1 = (n * OH1 + ih) * OW1 + iw
                            sel[i * KW2 + j, m2, m1] = 1.0

    w1_mat, b1_row, w2_off, b2_row, sel = map(
        jnp.asarray, (w1_mat, b1_row, w2_off, b2_row, sel))

    vmem = pl.BlockSpec(memory_space=pltpu.MemorySpace.VMEM)
    fused = pl.pallas_call(
        _fused_encoder_kernel,
        out_shape=jax.ShapeDtypeStruct((M2P, OC2P), jnp.float32),
        in_specs=[vmem] * 6,
        out_specs=vmem,
    )

    def forward(x):
        # im2col for conv1 (the only NCHW -> patch-layout conversion), padded
        # to lane/sublane-aligned GEMM shapes.  K ordering c*KH*KW + i*KW + j
        # matches the packed weight layout.
        xp = jnp.pad(x, ((0, 0), (0, 0), (pad, pad), (pad, pad)))
        cols = [xp[:, :, i:i + stride * OH1:stride, j:j + stride * OW1:stride]
                for i in range(KH) for j in range(KW)]
        patches = jnp.stack(cols, axis=-1)                  # (N,C,OH1,OW1,KH*KW)
        patches = patches.transpose(0, 2, 3, 1, 4).reshape(M1, K1)
        p1 = jnp.pad(patches, ((0, M1P - M1), (0, K1P - K1)))

        out = fused(p1, w1_mat, b1_row, sel, w2_off, b2_row)   # (M2P, OC2P)
        out = out[:M2, :OC2].reshape(N, OH2, OW2, OC2).transpose(0, 3, 1, 2)
        return out

    return jax.jit(forward)


# ----------------------------------------------------------------------------
# Init + pure-JAX reference
# ----------------------------------------------------------------------------
def init_params(key):
    k1, k2, k3, k4 = jax.random.split(key, 4)
    fan1 = 3 * 4 * 4
    fan2 = 12 * 4 * 4
    w1 = jax.random.uniform(k1, (12, 3, 4, 4), jnp.float32,
                            -1.0 / np.sqrt(fan1), 1.0 / np.sqrt(fan1))
    b1 = jax.random.uniform(k2, (12,), jnp.float32,
                            -1.0 / np.sqrt(fan1), 1.0 / np.sqrt(fan1))
    w2 = jax.random.uniform(k3, (24, 12, 4, 4), jnp.float32,
                            -1.0 / np.sqrt(fan2), 1.0 / np.sqrt(fan2))
    b2 = jax.random.uniform(k4, (24,), jnp.float32,
                            -1.0 / np.sqrt(fan2), 1.0 / np.sqrt(fan2))
    return (w1, b1, w2, b2)


def _ref_conv(x, w, b, stride, pad):
    out = jax.lax.conv_general_dilated(
        x, w, window_strides=(stride, stride), padding=[(pad, pad), (pad, pad)],
        dimension_numbers=("NCHW", "OIHW", "NCHW"))
    return out + b.reshape(1, -1, 1, 1)


if __name__ == "__main__":
    key = jax.random.PRNGKey(0)
    pkey, xkey = jax.random.split(key)
    params = init_params(pkey)

    # NCHW input consistent with Conv2d(3, ...) : (batch=2, C=3, H=16, W=16)
    x = jax.random.normal(xkey, (2, 3, 16, 16), jnp.float32)

    forward = make_img_encoder(params, x.shape)
    y = jax.block_until_ready(forward(x))
    assert y.shape == (2, 24, 4, 4), y.shape

    # Cross-check against a pure-JAX convolution reference.
    w1, b1, w2, b2 = params
    y_ref = _ref_conv(_ref_conv(x, w1, b1, 2, 1), w2, b2, 2, 1)
    np.testing.assert_allclose(np.asarray(y), np.asarray(y_ref),
                               rtol=1e-3, atol=1e-3)

    print("KERNEL_OK")
</pallas_src>

<mosaic_0001>
module attributes {stable_mosaic.version = 11 : i64} {
  func.func @_fused_encoder_kernel(%arg0: memref<128x128xf32, #tpu.memory_space<vmem>>, %arg1: memref<128x128xf32, #tpu.memory_space<vmem>>, %arg2: memref<1x128xf32, #tpu.memory_space<vmem>>, %arg3: memref<16x32x128xf32, #tpu.memory_space<vmem>>, %arg4: memref<16x128x128xf32, #tpu.memory_space<vmem>>, %arg5: memref<1x128xf32, #tpu.memory_space<vmem>>, %arg6: memref<32x128xf32, #tpu.memory_space<vmem>>) attributes {dimension_semantics = [], scalar_prefetch = 0 : i64, scratch_operands = 0 : i64, tpu.core_type = #tpu.core_type<tc>} {
    %c0 = arith.constant 0 : index
    %c0_0 = arith.constant 0 : index
    %0 = vector.load %arg0[%c0, %c0_0] : memref<128x128xf32, #tpu.memory_space<vmem>>, vector<128x128xf32>
    %c0_1 = arith.constant 0 : index
    %c0_2 = arith.constant 0 : index
    %1 = vector.load %arg1[%c0_1, %c0_2] : memref<128x128xf32, #tpu.memory_space<vmem>>, vector<128x128xf32>
    %cst = arith.constant dense<0.000000e+00> : vector<128x128xf32>
    %2 = tpu.matmul %0, %1, %cst {dimension_numbers = #tpu.dot_dimension_numbers<[1], [0], [0], [1], [0, 0, 1, 1], [], []>} : vector<128x128xf32>, vector<128x128xf32>, vector<128x128xf32> -> vector<128x128xf32>
    %c0_3 = arith.constant 0 : index
    %c0_4 = arith.constant 0 : index
    %3 = vector.load %arg2[%c0_3, %c0_4] : memref<1x128xf32, #tpu.memory_space<vmem>>, vector<1x128xf32>
    %4 = vector.broadcast %3 : vector<1x128xf32> to vector<128x128xf32>
    %5 = arith.addf %2, %4 : vector<128x128xf32>
    %cst_5 = arith.constant 0.000000e+00 : f32
    %6 = vector.broadcast %cst_5 : f32 to vector<32x128xf32>
    %c0_6 = arith.constant 0 : index
    %c0_7 = arith.constant 0 : index
    %c0_8 = arith.constant 0 : index
    %7 = vector.load %arg3[%c0_6, %c0_7, %c0_8] : memref<16x32x128xf32, #tpu.memory_space<vmem>>, vector<1x32x128xf32>
    %8 = vector.shape_cast %7 : vector<1x32x128xf32> to vector<32x128xf32>
    %cst_9 = arith.constant dense<0.000000e+00> : vector<32x128xf32>
    %9 = tpu.matmul %8, %5, %cst_9 {dimension_numbers = #tpu.dot_dimension_numbers<[1], [0], [0], [1], [0, 0, 1, 1], [], []>} : vector<32x128xf32>, vector<128x128xf32>, vector<32x128xf32> -> vector<32x128xf32>
    %c0_10 = arith.constant 0 : index
    %c0_11 = arith.constant 0 : index
    %c0_12 = arith.constant 0 : index
    %10 = vector.load %arg4[%c0_10, %c0_11, %c0_12] : memref<16x128x128xf32, #tpu.memory_space<vmem>>, vector<1x128x128xf32>
    %11 = vector.shape_cast %10 : vector<1x128x128xf32> to vector<128x128xf32>
    %cst_13 = arith.constant dense<0.000000e+00> : vector<32x128xf32>
    %12 = tpu.matmul %9, %11, %cst_13 {dimension_numbers = #tpu.dot_dimension_numbers<[1], [0], [0], [1], [0, 0, 1, 1], [], []>} : vector<32x128xf32>, vector<128x128xf32>, vector<32x128xf32> -> vector<32x128xf32>
    %13 = arith.addf %6, %12 : vector<32x128xf32>
    %c1 = arith.constant 1 : index
    %c0_14 = arith.constant 0 : index
    %c0_15 = arith.constant 0 : index
    %14 = vector.load %arg3[%c1, %c0_14, %c0_15] : memref<16x32x128xf32, #tpu.memory_space<vmem>>, vector<1x32x128xf32>
    %15 = vector.shape_cast %14 : vector<1x32x128xf32> to vector<32x128xf32>
    %cst_16 = arith.constant dense<0.000000e+00> : vector<32x128xf32>
    %16 = tpu.matmul %15, %5, %cst_16 {dimension_numbers = #tpu.dot_dimension_numbers<[1], [0], [0], [1], [0, 0, 1, 1], [], []>} : vector<32x128xf32>, vector<128x128xf32>, vector<32x128xf32> -> vector<32x128xf32>
    %c1_17 = arith.constant 1 : index
    %c0_18 = arith.constant 0 : index
    %c0_19 = arith.constant 0 : index
    %17 = vector.load %arg4[%c1_17, %c0_18, %c0_19] : memref<16x128x128xf32, #tpu.memory_space<vmem>>, vector<1x128x128xf32>
    %18 = vector.shape_cast %17 : vector<1x128x128xf32> to vector<128x128xf32>
    %cst_20 = arith.constant dense<0.000000e+00> : vector<32x128xf32>
    %19 = tpu.matmul %16, %18, %cst_20 {dimension_numbers = #tpu.dot_dimension_numbers<[1], [0], [0], [1], [0, 0, 1, 1], [], []>} : vector<32x128xf32>, vector<128x128xf32>, vector<32x128xf32> -> vector<32x128xf32>
    %20 = arith.addf %13, %19 : vector<32x128xf32>
    %c2 = arith.constant 2 : index
    %c0_21 = arith.constant 0 : index
    %c0_22 = arith.constant 0 : index
    %21 = vector.load %arg3[%c2, %c0_21, %c0_22] : memref<16x32x128xf32, #tpu.memory_space<vmem>>, vector<1x32x128xf32>
    %22 = vector.shape_cast %21 : vector<1x32x128xf32> to vector<32x128xf32>
    %cst_23 = arith.constant dense<0.000000e+00> : vector<32x128xf32>
    %23 = tpu.matmul %22, %5, %cst_23 {dimension_numbers = #tpu.dot_dimension_numbers<[1], [0], [0], [1], [0, 0, 1, 1], [], []>} : vector<32x128xf32>, vector<128x128xf32>, vector<32x128xf32> -> vector<32x128xf32>
    %c2_24 = arith.constant 2 : index
    %c0_25 = arith.constant 0 : index
    %c0_26 = arith.constant 0 : index
    %24 = vector.load %arg4[%c2_24, %c0_25, %c0_26] : memref<16x128x128xf32, #tpu.memory_space<vmem>>, vector<1x128x128xf32>
    %25 = vector.shape_cast %24 : vector<1x128x128xf32> to vector<128x128xf32>
    %cst_27 = arith.constant dense<0.000000e+00> : vector<32x128xf32>
    %26 = tpu.matmul %23, %25, %cst_27 {dimension_numbers = #tpu.dot_dimension_numbers<[1], [0], [0], [1], [0, 0, 1, 1], [], []>} : vector<32x128xf32>, vector<128x128xf32>, vector<32x128xf32> -> vector<32x128xf32>
    %27 = arith.addf %20, %26 : vector<32x128xf32>
    %c3 = arith.constant 3 : index
    %c0_28 = arith.constant 0 : index
    %c0_29 = arith.constant 0 : index
    %28 = vector.load %arg3[%c3, %c0_28, %c0_29] : memref<16x32x128xf32, #tpu.memory_space<vmem>>, vector<1x32x128xf32>
    %29 = vector.shape_cast %28 : vector<1x32x128xf32> to vector<32x128xf32>
    %cst_30 = arith.constant dense<0.000000e+00> : vector<32x128xf32>
    %30 = tpu.matmul %29, %5, %cst_30 {dimension_numbers = #tpu.dot_dimension_numbers<[1], [0], [0], [1], [0, 0, 1, 1], [], []>} : vector<32x128xf32>, vector<128x128xf32>, vector<32x128xf32> -> vector<32x128xf32>
    %c3_31 = arith.constant 3 : index
    %c0_32 = arith.constant 0 : index
    %c0_33 = arith.constant 0 : index
    %31 = vector.load %arg4[%c3_31, %c0_32, %c0_33] : memref<16x128x128xf32, #tpu.memory_space<vmem>>, vector<1x128x128xf32>
    %32 = vector.shape_cast %31 : vector<1x128x128xf32> to vector<128x128xf32>
    %cst_34 = arith.constant dense<0.000000e+00> : vector<32x128xf32>
    %33 = tpu.matmul %30, %32, %cst_34 {dimension_numbers = #tpu.dot_dimension_numbers<[1], [0], [0], [1], [0, 0, 1, 1], [], []>} : vector<32x128xf32>, vector<128x128xf32>, vector<32x128xf32> -> vector<32x128xf32>
    %34 = arith.addf %27, %33 : vector<32x128xf32>
    %c4 = arith.constant 4 : index
    %c0_35 = arith.constant 0 : index
    %c0_36 = arith.constant 0 : index
    %35 = vector.load %arg3[%c4, %c0_35, %c0_36] : memref<16x32x128xf32, #tpu.memory_space<vmem>>, vector<1x32x128xf32>
    %36 = vector.shape_cast %35 : vector<1x32x128xf32> to vector<32x128xf32>
    %cst_37 = arith.constant dense<0.000000e+00> : vector<32x128xf32>
    %37 = tpu.matmul %36, %5, %cst_37 {dimension_numbers = #tpu.dot_dimension_numbers<[1], [0], [0], [1], [0, 0, 1, 1], [], []>} : vector<32x128xf32>, vector<128x128xf32>, vector<32x128xf32> -> vector<32x128xf32>
    %c4_38 = arith.constant 4 : index
    %c0_39 = arith.constant 0 : index
    %c0_40 = arith.constant 0 : index
    %38 = vector.load %arg4[%c4_38, %c0_39, %c0_40] : memref<16x128x128xf32, #tpu.memory_space<vmem>>, vector<1x128x128xf32>
    %39 = vector.shape_cast %38 : vector<1x128x128xf32> to vector<128x128xf32>
    %cst_41 = arith.constant dense<0.000000e+00> : vector<32x128xf32>
    %40 = tpu.matmul %37, %39, %cst_41 {dimension_numbers = #tpu.dot_dimension_numbers<[1], [0], [0], [1], [0, 0, 1, 1], [], []>} : vector<32x128xf32>, vector<128x128xf32>, vector<32x128xf32> -> vector<32x128xf32>
    %41 = arith.addf %34, %40 : vector<32x128xf32>
    %c5 = arith.constant 5 : index
    %c0_42 = arith.constant 0 : index
    %c0_43 = arith.constant 0 : index
    %42 = vector.load %arg3[%c5, %c0_42, %c0_43] : memref<16x32x128xf32, #tpu.memory_space<vmem>>, vector<1x32x128xf32>
    %43 = vector.shape_cast %42 : vector<1x32x128xf32> to vector<32x128xf32>
    %cst_44 = arith.constant dense<0.000000e+00> : vector<32x128xf32>
    %44 = tpu.matmul %43, %5, %cst_44 {dimension_numbers = #tpu.dot_dimension_numbers<[1], [0], [0], [1], [0, 0, 1, 1], [], []>} : vector<32x128xf32>, vector<128x128xf32>, vector<32x128xf32> -> vector<32x128xf32>
    %c5_45 = arith.constant 5 : index
    %c0_46 = arith.constant 0 : index
    %c0_47 = arith.constant 0 : index
    %45 = vector.load %arg4[%c5_45, %c0_46, %c0_47] : memref<16x128x128xf32, #tpu.memory_space<vmem>>, vector<1x128x128xf32>
    %46 = vector.shape_cast %45 : vector<1x128x128xf32> to vector<128x128xf32>
    %cst_48 = arith.constant dense<0.000000e+00> : vector<32x128xf32>
    %47 = tpu.matmul %44, %46, %cst_48 {dimension_numbers = #tpu.dot_dimension_numbers<[1], [0], [0], [1], [0, 0, 1, 1], [], []>} : vector<32x128xf32>, vector<128x128xf32>, vector<32x128xf32> -> vector<32x128xf32>
    %48 = arith.addf %41, %47 : vector<32x128xf32>
    %c6 = arith.constant 6 : index
    %c0_49 = arith.constant 0 : index
    %c0_50 = arith.constant 0 : index
    %49 = vector.load %arg3[%c6, %c0_49, %c0_50] : memref<16x32x128xf32, #tpu.memory_space<vmem>>, vector<1x32x128xf32>
    %50 = vector.shape_cast %49 : vector<1x32x128xf32> to vector<32x128xf32>
    %cst_51 = arith.constant dense<0.000000e+00> : vector<32x128xf32>
    %51 = tpu.matmul %50, %5, %cst_51 {dimension_numbers = #tpu.dot_dimension_numbers<[1], [0], [0], [1], [0, 0, 1, 1], [], []>} : vector<32x128xf32>, vector<128x128xf32>, vector<32x128xf32> -> vector<32x128xf32>
    %c6_52 = arith.constant 6 : index
    %c0_53 = arith.constant 0 : index
    %c0_54 = arith.constant 0 : index
    %52 = vector.load %arg4[%c6_52, %c0_53, %c0_54] : memref<16x128x128xf32, #tpu.memory_space<vmem>>, vector<1x128x128xf32>
    %53 = vector.shape_cast %52 : vector<1x128x128xf32> to vector<128x128xf32>
    %cst_55 = arith.constant dense<0.000000e+00> : vector<32x128xf32>
    %54 = tpu.matmul %51, %53, %cst_55 {dimension_numbers = #tpu.dot_dimension_numbers<[1], [0], [0], [1], [0, 0, 1, 1], [], []>} : vector<32x128xf32>, vector<128x128xf32>, vector<32x128xf32> -> vector<32x128xf32>
    %55 = arith.addf %48, %54 : vector<32x128xf32>
    %c7 = arith.constant 7 : index
    %c0_56 = arith.constant 0 : index
    %c0_57 = arith.constant 0 : index
    %56 = vector.load %arg3[%c7, %c0_56, %c0_57] : memref<16x32x128xf32, #tpu.memory_space<vmem>>, vector<1x32x128xf32>
    %57 = vector.shape_cast %56 : vector<1x32x128xf32> to vector<32x128xf32>
    %cst_58 = arith.constant dense<0.000000e+00> : vector<32x128xf32>
    %58 = tpu.matmul %57, %5, %cst_58 {dimension_numbers = #tpu.dot_dimension_numbers<[1], [0], [0], [1], [0, 0, 1, 1], [], []>} : vector<32x128xf32>, vector<128x128xf32>, vector<32x128xf32> -> vector<32x128xf32>
    %c7_59 = arith.constant 7 : index
    %c0_60 = arith.constant 0 : index
    %c0_61 = arith.constant 0 : index
    %59 = vector.load %arg4[%c7_59, %c0_60, %c0_61] : memref<16x128x128xf32, #tpu.memory_space<vmem>>, vector<1x128x128xf32>
    %60 = vector.shape_cast %59 : vector<1x128x128xf32> to vector<128x128xf32>
    %cst_62 = arith.constant dense<0.000000e+00> : vector<32x128xf32>
    %61 = tpu.matmul %58, %60, %cst_62 {dimension_numbers = #tpu.dot_dimension_numbers<[1], [0], [0], [1], [0, 0, 1, 1], [], []>} : vector<32x128xf32>, vector<128x128xf32>, vector<32x128xf32> -> vector<32x128xf32>
    %62 = arith.addf %55, %61 : vector<32x128xf32>
    %c8 = arith.constant 8 : index
    %c0_63 = arith.constant 0 : index
    %c0_64 = arith.constant 0 : index
    %63 = vector.load %arg3[%c8, %c0_63, %c0_64] : memref<16x32x128xf32, #tpu.memory_space<vmem>>, vector<1x32x128xf32>
    %64 = vector.shape_cast %63 : vector<1x32x128xf32> to vector<32x128xf32>
    %cst_65 = arith.constant dense<0.000000e+00> : vector<32x128xf32>
    %65 = tpu.matmul %64, %5, %cst_65 {dimension_numbers = #tpu.dot_dimension_numbers<[1], [0], [0], [1], [0, 0, 1, 1], [], []>} : vector<32x128xf32>, vector<128x128xf32>, vector<32x128xf32> -> vector<32x128xf32>
    %c8_66 = arith.constant 8 : index
    %c0_67 = arith.constant 0 : index
    %c0_68 = arith.constant 0 : index
    %66 = vector.load %arg4[%c8_66, %c0_67, %c0_68] : memref<16x128x128xf32, #tpu.memory_space<vmem>>, vector<1x128x128xf32>
    %67 = vector.shape_cast %66 : vector<1x128x128xf32> to vector<128x128xf32>
    %cst_69 = arith.constant dense<0.000000e+00> : vector<32x128xf32>
    %68 = tpu.matmul %65, %67, %cst_69 {dimension_numbers = #tpu.dot_dimension_numbers<[1], [0], [0], [1], [0, 0, 1, 1], [], []>} : vector<32x128xf32>, vector<128x128xf32>, vector<32x128xf32> -> vector<32x128xf32>
    %69 = arith.addf %62, %68 : vector<32x128xf32>
    %c9 = arith.constant 9 : index
    %c0_70 = arith.constant 0 : index
    %c0_71 = arith.constant 0 : index
    %70 = vector.load %arg3[%c9, %c0_70, %c0_71] : memref<16x32x128xf32, #tpu.memory_space<vmem>>, vector<1x32x128xf32>
    %71 = vector.shape_cast %70 : vector<1x32x128xf32> to vector<32x128xf32>
    %cst_72 = arith.constant dense<0.000000e+00> : vector<32x128xf32>
    %72 = tpu.matmul %71, %5, %cst_72 {dimension_numbers = #tpu.dot_dimension_numbers<[1], [0], [0], [1], [0, 0, 1, 1], [], []>} : vector<32x128xf32>, vector<128x128xf32>, vector<32x128xf32> -> vector<32x128xf32>
    %c9_73 = arith.constant 9 : index
    %c0_74 = arith.constant 0 : index
    %c0_75 = arith.constant 0 : index
    %73 = vector.load %arg4[%c9_73, %c0_74, %c0_75] : memref<16x128x128xf32, #tpu.memory_space<vmem>>, vector<1x128x128xf32>
    %74 = vector.shape_cast %73 : vector<1x128x128xf32> to vector<128x128xf32>
    %cst_76 = arith.constant dense<0.000000e+00> : vector<32x128xf32>
    %75 = tpu.matmul %72, %74, %cst_76 {dimension_numbers = #tpu.dot_dimension_numbers<[1], [0], [0], [1], [0, 0, 1, 1], [], []>} : vector<32x128xf32>, vector<128x128xf32>, vector<32x128xf32> -> vector<32x128xf32>
    %76 = arith.addf %69, %75 : vector<32x128xf32>
    %c10 = arith.constant 10 : index
    %c0_77 = arith.constant 0 : index
    %c0_78 = arith.constant 0 : index
    %77 = vector.load %arg3[%c10, %c0_77, %c0_78] : memref<16x32x128xf32, #tpu.memory_space<vmem>>, vector<1x32x128xf32>
    %78 = vector.shape_cast %77 : vector<1x32x128xf32> to vector<32x128xf32>
    %cst_79 = arith.constant dense<0.000000e+00> : vector<32x128xf32>
    %79 = tpu.matmul %78, %5, %cst_79 {dimension_numbers = #tpu.dot_dimension_numbers<[1], [0], [0], [1], [0, 0, 1, 1], [], []>} : vector<32x128xf32>, vector<128x128xf32>, vector<32x128xf32> -> vector<32x128xf32>
    %c10_80 = arith.constant 10 : index
    %c0_81 = arith.constant 0 : index
    %c0_82 = arith.constant 0 : index
    %80 = vector.load %arg4[%c10_80, %c0_81, %c0_82] : memref<16x128x128xf32, #tpu.memory_space<vmem>>, vector<1x128x128xf32>
    %81 = vector.shape_cast %80 : vector<1x128x128xf32> to vector<128x128xf32>
    %cst_83 = arith.constant dense<0.000000e+00> : vector<32x128xf32>
    %82 = tpu.matmul %79, %81, %cst_83 {dimension_numbers = #tpu.dot_dimension_numbers<[1], [0], [0], [1], [0, 0, 1, 1], [], []>} : vector<32x128xf32>, vector<128x128xf32>, vector<32x128xf32> -> vector<32x128xf32>
    %83 = arith.addf %76, %82 : vector<32x128xf32>
    %c11 = arith.constant 11 : index
    %c0_84 = arith.constant 0 : index
    %c0_85 = arith.constant 0 : index
    %84 = vector.load %arg3[%c11, %c0_84, %c0_85] : memref<16x32x128xf32, #tpu.memory_space<vmem>>, vector<1x32x128xf32>
    %85 = vector.shape_cast %84 : vector<1x32x128xf32> to vector<32x128xf32>
    %cst_86 = arith.constant dense<0.000000e+00> : vector<32x128xf32>
    %86 = tpu.matmul %85, %5, %cst_86 {dimension_numbers = #tpu.dot_dimension_numbers<[1], [0], [0], [1], [0, 0, 1, 1], [], []>} : vector<32x128xf32>, vector<128x128xf32>, vector<32x128xf32> -> vector<32x128xf32>
    %c11_87 = arith.constant 11 : index
    %c0_88 = arith.constant 0 : index
    %c0_89 = arith.constant 0 : index
    %87 = vector.load %arg4[%c11_87, %c0_88, %c0_89] : memref<16x128x128xf32, #tpu.memory_space<vmem>>, vector<1x128x128xf32>
    %88 = vector.shape_cast %87 : vector<1x128x128xf32> to vector<128x128xf32>
    %cst_90 = arith.constant dense<0.000000e+00> : vector<32x128xf32>
    %89 = tpu.matmul %86, %88, %cst_90 {dimension_numbers = #tpu.dot_dimension_numbers<[1], [0], [0], [1], [0, 0, 1, 1], [], []>} : vector<32x128xf32>, vector<128x128xf32>, vector<32x128xf32> -> vector<32x128xf32>
    %90 = arith.addf %83, %89 : vector<32x128xf32>
    %c12 = arith.constant 12 : index
    %c0_91 = arith.constant 0 : index
    %c0_92 = arith.constant 0 : index
    %91 = vector.load %arg3[%c12, %c0_91, %c0_92] : memref<16x32x128xf32, #tpu.memory_space<vmem>>, vector<1x32x128xf32>
    %92 = vector.shape_cast %91 : vector<1x32x128xf32> to vector<32x128xf32>
    %cst_93 = arith.constant dense<0.000000e+00> : vector<32x128xf32>
    %93 = tpu.matmul %92, %5, %cst_93 {dimension_numbers = #tpu.dot_dimension_numbers<[1], [0], [0], [1], [0, 0, 1, 1], [], []>} : vector<32x128xf32>, vector<128x128xf32>, vector<32x128xf32> -> vector<32x128xf32>
    %c12_94 = arith.constant 12 : index
    %c0_95 = arith.constant 0 : index
    %c0_96 = arith.constant 0 : index
    %94 = vector.load %arg4[%c12_94, %c0_95, %c0_96] : memref<16x128x128xf32, #tpu.memory_space<vmem>>, vector<1x128x128xf32>
    %95 = vector.shape_cast %94 : vector<1x128x128xf32> to vector<128x128xf32>
    %cst_97 = arith.constant dense<0.000000e+00> : vector<32x128xf32>
    %96 = tpu.matmul %93, %95, %cst_97 {dimension_numbers = #tpu.dot_dimension_numbers<[1], [0], [0], [1], [0, 0, 1, 1], [], []>} : vector<32x128xf32>, vector<128x128xf32>, vector<32x128xf32> -> vector<32x128xf32>
    %97 = arith.addf %90, %96 : vector<32x128xf32>
    %c13 = arith.constant 13 : index
    %c0_98 = arith.constant 0 : index
    %c0_99 = arith.constant 0 : index
    %98 = vector.load %arg3[%c13, %c0_98, %c0_99] : memref<16x32x128xf32, #tpu.memory_space<vmem>>, vector<1x32x128xf32>
    %99 = vector.shape_cast %98 : vector<1x32x128xf32> to vector<32x128xf32>
    %cst_100 = arith.constant dense<0.000000e+00> : vector<32x128xf32>
    %100 = tpu.matmul %99, %5, %cst_100 {dimension_numbers = #tpu.dot_dimension_numbers<[1], [0], [0], [1], [0, 0, 1, 1], [], []>} : vector<32x128xf32>, vector<128x128xf32>, vector<32x128xf32> -> vector<32x128xf32>
    %c13_101 = arith.constant 13 : index
    %c0_102 = arith.constant 0 : index
    %c0_103 = arith.constant 0 : index
    %101 = vector.load %arg4[%c13_101, %c0_102, %c0_103] : memref<16x128x128xf32, #tpu.memory_space<vmem>>, vector<1x128x128xf32>
    %102 = vector.shape_cast %101 : vector<1x128x128xf32> to vector<128x128xf32>
    %cst_104 = arith.constant dense<0.000000e+00> : vector<32x128xf32>
    %103 = tpu.matmul %100, %102, %cst_104 {dimension_numbers = #tpu.dot_dimension_numbers<[1], [0], [0], [1], [0, 0, 1, 1], [], []>} : vector<32x128xf32>, vector<128x128xf32>, vector<32x128xf32> -> vector<32x128xf32>
    %104 = arith.addf %97, %103 : vector<32x128xf32>
    %c14 = arith.constant 14 : index
    %c0_105 = arith.constant 0 : index
    %c0_106 = arith.constant 0 : index
    %105 = vector.load %arg3[%c14, %c0_105, %c0_106] : memref<16x32x128xf32, #tpu.memory_space<vmem>>, vector<1x32x128xf32>
    %106 = vector.shape_cast %105 : vector<1x32x128xf32> to vector<32x128xf32>
    %cst_107 = arith.constant dense<0.000000e+00> : vector<32x128xf32>
    %107 = tpu.matmul %106, %5, %cst_107 {dimension_numbers = #tpu.dot_dimension_numbers<[1], [0], [0], [1], [0, 0, 1, 1], [], []>} : vector<32x128xf32>, vector<128x128xf32>, vector<32x128xf32> -> vector<32x128xf32>
    %c14_108 = arith.constant 14 : index
    %c0_109 = arith.constant 0 : index
    %c0_110 = arith.constant 0 : index
    %108 = vector.load %arg4[%c14_108, %c0_109, %c0_110] : memref<16x128x128xf32, #tpu.memory_space<vmem>>, vector<1x128x128xf32>
    %109 = vector.shape_cast %108 : vector<1x128x128xf32> to vector<128x128xf32>
    %cst_111 = arith.constant dense<0.000000e+00> : vector<32x128xf32>
    %110 = tpu.matmul %107, %109, %cst_111 {dimension_numbers = #tpu.dot_dimension_numbers<[1], [0], [0], [1], [0, 0, 1, 1], [], []>} : vector<32x128xf32>, vector<128x128xf32>, vector<32x128xf32> -> vector<32x128xf32>
    %111 = arith.addf %104, %110 : vector<32x128xf32>
    %c15 = arith.constant 15 : index
    %c0_112 = arith.constant 0 : index
    %c0_113 = arith.constant 0 : index
    %112 = vector.load %arg3[%c15, %c0_112, %c0_113] : memref<16x32x128xf32, #tpu.memory_space<vmem>>, vector<1x32x128xf32>
    %113 = vector.shape_cast %112 : vector<1x32x128xf32> to vector<32x128xf32>
    %cst_114 = arith.constant dense<0.000000e+00> : vector<32x128xf32>
    %114 = tpu.matmul %113, %5, %cst_114 {dimension_numbers = #tpu.dot_dimension_numbers<[1], [0], [0], [1], [0, 0, 1, 1], [], []>} : vector<32x128xf32>, vector<128x128xf32>, vector<32x128xf32> -> vector<32x128xf32>
    %c15_115 = arith.constant 15 : index
    %c0_116 = arith.constant 0 : index
    %c0_117 = arith.constant 0 : index
    %115 = vector.load %arg4[%c15_115, %c0_116, %c0_117] : memref<16x128x128xf32, #tpu.memory_space<vmem>>, vector<1x128x128xf32>
    %116 = vector.shape_cast %115 : vector<1x128x128xf32> to vector<128x128xf32>
    %cst_118 = arith.constant dense<0.000000e+00> : vector<32x128xf32>
    %117 = tpu.matmul %114, %116, %cst_118 {dimension_numbers = #tpu.dot_dimension_numbers<[1], [0], [0], [1], [0, 0, 1, 1], [], []>} : vector<32x128xf32>, vector<128x128xf32>, vector<32x128xf32> -> vector<32x128xf32>
    %118 = arith.addf %111, %117 : vector<32x128xf32>
    %c0_119 = arith.constant 0 : index
    %c0_120 = arith.constant 0 : index
    %119 = vector.load %arg5[%c0_119, %c0_120] : memref<1x128xf32, #tpu.memory_space<vmem>>, vector<1x128xf32>
    %120 = vector.broadcast %119 : vector<1x128xf32> to vector<32x128xf32>
    %121 = arith.addf %118, %120 : vector<32x128xf32>
    %c0_121 = arith.constant 0 : index
    %c0_122 = arith.constant 0 : index
    %122 = vector.load %arg6[%c0_121, %c0_122] : memref<32x128xf32, #tpu.memory_space<vmem>>, vector<32x128xf32>
    tpu.vector_store %arg6[%c0_121, %c0_122], %121 {strides = array<i32>} : memref<32x128xf32, #tpu.memory_space<vmem>>, vector<32x128xf32>,
    return
  }
}

</mosaic_0001>

<llo_original>
// kernel: forward.1
$region0: #{forward.1}
  #allocation0 [shape = 'u32[]', space=smem, size = 0x4, offset = 0x4, fixed_abs, tag = 'smem constant byte address 0x4 - core index']
  #allocation1 [shape = 'u32[72,128]{1,0:T(1,128)}', space=vmem, size = 0x9000, scoped, tag = 'internal scratch']
  %s0 = inlined_call_operand.vmem [shape: f32[128,128], index: 0, kind: input, shape index: {}]
  %s1 = inlined_call_operand.vmem [shape: f32[128,128], index: 1, kind: input, shape index: {}]
  %s2 = inlined_call_operand.vmem [shape: f32[1,128], index: 2, kind: input, shape index: {}]
  %s3 = inlined_call_operand.vmem [shape: f32[16,32,128], index: 3, kind: input, shape index: {}]
  %s4 = inlined_call_operand.vmem [shape: f32[16,128,128], index: 4, kind: input, shape index: {}]
  %s5 = inlined_call_operand.vmem [shape: f32[1,128], index: 5, kind: input, shape index: {}]
  %s6 = inlined_call_operand.hbm [shape: f32[32,128], index: 6, kind: output, shape index: {}]
  %s7 = sld [smem:[#allocation0]]
  $region34: #{forward.1} parent=0
    _
  %s9 = ssub.s32 1, %s7
  %s10 = scalar_select 0, %s9, %s7
  $region1: #{forward.1} parent=0
    #allocation2 [shape = 'u8[16384]{0}', space=vmem, size = 0x4000, scoped, tag = 'output window, operand 0, single buffered']
    #allocation3 [shape = 's32[1]{0}', space=sflag, size = 0x4, scoped, tag = 'scoped memory for forward.1']
    %11 = vsyncpa [#allocation3], 0
    // Predicated region
    $region2: #{forward.1} parent=1 // pred_check
      _
    $region3: #{forward.1} parent=1 // pred_check_branch
      %13 = sbr.rel (0) target = $region5
    $region4: #{forward.1} parent=1 // pred_region
      _
    $region5: #{forward.1} parent=1 // pred_fallthru
      _
    // Predicated region
    $region6: #{forward.1} parent=1 // pred_check
      _
    $region7: #{forward.1} parent=1 // pred_check_branch
      %15 = sbr.rel (0) target = $region9
    $region8: #{forward.1} parent=1 // pred_region
      _
    $region9: #{forward.1} parent=1 // pred_fallthru
      _
    // Predicated region
    $region10: #{forward.1} parent=1 // pred_check
      _
    $region11: #{forward.1} parent=1 // pred_check_branch
      %17 = sbr.rel (0) target = $region13
    $region12: #{forward.1} parent=1 // pred_region
      _
    $region13: #{forward.1} parent=1 // pred_fallthru
      _
    // Predicated region
    $region14: #{forward.1} parent=1 // pred_check
      _
    $region15: #{forward.1} parent=1 // pred_check_branch
      %19 = sbr.rel (0) target = $region17
    $region16: #{forward.1} parent=1 // pred_region
      _
    $region17: #{forward.1} parent=1 // pred_fallthru
      _
    // Predicated region
    $region18: #{forward.1} parent=1 // pred_check
      _
    $region19: #{forward.1} parent=1 // pred_check_branch
      %21 = sbr.rel (0) target = $region21
    $region20: #{forward.1} parent=1 // pred_region
      _
    $region21: #{forward.1} parent=1 // pred_fallthru
      _
    // Predicated region
    $region22: #{forward.1} parent=1 // pred_check
      _
    $region23: #{forward.1} parent=1 // pred_check_branch
      %23 = sbr.rel (0) target = $region25
    $region24: #{forward.1} parent=1 // pred_region
      _
    $region25: #{forward.1} parent=1 // pred_fallthru
      _
    %v24 = vld [vmem:[%s0] sm:$0xff]
    %v25 = vld [vmem:[%s0 + $0x8] sm:$0xff]
    %v26 = vld [vmem:[%s0 + $0x10] sm:$0xff]
    %v27 = vld [vmem:[%s0 + $0x18] sm:$0xff]
    %v28 = vld [vmem:[%s0 + $0x20] sm:$0xff]
    %v29 = vld [vmem:[%s0 + $0x28] sm:$0xff]
    %v30 = vld [vmem:[%s0 + $0x30] sm:$0xff]
    %v31 = vld [vmem:[%s0 + $0x38] sm:$0xff]
    %v32 = vld [vmem:[%s0 + $0x40] sm:$0xff]
    %v33 = vld [vmem:[%s0 + $0x48] sm:$0xff]
    %v34 = vld [vmem:[%s0 + $0x50] sm:$0xff]
    %v35 = vld [vmem:[%s0 + $0x58] sm:$0xff]
    %v36 = vld [vmem:[%s0 + $0x60] sm:$0xff]
    %v37 = vld [vmem:[%s0 + $0x68] sm:$0xff]
    %v38 = vld [vmem:[%s0 + $0x70] sm:$0xff]
    %v39 = vld [vmem:[%s0 + $0x78] sm:$0xff]
    %v40 = vld [vmem:[%s1] sm:$0xff]
    %v41 = vld [vmem:[%s1 + $0x8] sm:$0xff]
    %v42 = vld [vmem:[%s1 + $0x10] sm:$0xff]
    %v43 = vld [vmem:[%s1 + $0x18] sm:$0xff]
    %v44 = vld [vmem:[%s1 + $0x20] sm:$0xff]
    %v45 = vld [vmem:[%s1 + $0x28] sm:$0xff]
    %v46 = vld [vmem:[%s1 + $0x30] sm:$0xff]
    %v47 = vld [vmem:[%s1 + $0x38] sm:$0xff]
    %v48 = vld [vmem:[%s1 + $0x40] sm:$0xff]
    %v49 = vld [vmem:[%s1 + $0x48] sm:$0xff]
    %v50 = vld [vmem:[%s1 + $0x50] sm:$0xff]
    %v51 = vld [vmem:[%s1 + $0x58] sm:$0xff]
    %v52 = vld [vmem:[%s1 + $0x60] sm:$0xff]
    %v53 = vld [vmem:[%s1 + $0x68] sm:$0xff]
    %v54 = vld [vmem:[%s1 + $0x70] sm:$0xff]
    %v55 = vld [vmem:[%s1 + $0x78] sm:$0xff]
    %v56 = vld [vmem:[%s2] sm:$0x1]
    %v58 = vperm.slane %v56, 0
    %60 = vmatpush.msra.mxu0 %v55
    %61 = vmatpush.msra.mxu0 %v54
    %62 = vmatpush.msra.mxu0 %v53
    %63 = vmatpush.msra.mxu0 %v52
    %64 = vmatpush.msra.mxu0 %v51
    %65 = vmatpush.msra.mxu0 %v50
    %66 = vmatpush.msra.mxu0 %v49
    %67 = vmatpush.msra.mxu0 %v48
    %68 = vmatpush.msra.mxu0 %v47
    %69 = vmatpush.msra.mxu0 %v46
    %70 = vmatpush.msra.mxu0 %v45
    %71 = vmatpush.msra.mxu0 %v44
    %72 = vmatpush.msra.mxu0 %v43
    %73 = vmatpush.msra.mxu0 %v42
    %74 = vmatpush.msra.mxu0 %v41
    %75 = vmatpush.msra.mxu0 %v40
    %76 = vmatmul.f32.gmra.mxu0 %v24
    %v77 = vpop.f32.mrf.mxu0
    %v78 = vadd.f32 %v58, %v77
    %79 = vmatmul.f32.gmra.mxu0 %v25
    %v80 = vpop.f32.mrf.mxu0
    %v81 = vadd.f32 %v58, %v80
    %82 = vmatmul.f32.gmra.mxu0 %v26
    %v83 = vpop.f32.mrf.mxu0
    %v84 = vadd.f32 %v58, %v83
    %85 = vmatmul.f32.gmra.mxu0 %v27
    %v86 = vpop.f32.mrf.mxu0
    %v87 = vadd.f32 %v58, %v86
    %88 = vmatmul.f32.gmra.mxu0 %v28
    %v89 = vpop.f32.mrf.mxu0
    %v90 = vadd.f32 %v58, %v89
    %91 = vmatmul.f32.gmra.mxu0 %v29
    %v92 = vpop.f32.mrf.mxu0
    %v93 = vadd.f32 %v58, %v92
    %94 = vmatmul.f32.gmra.mxu0 %v30
    %v95 = vpop.f32.mrf.mxu0
    %v96 = vadd.f32 %v58, %v95
    %97 = vmatmul.f32.gmra.mxu0 %v31
    %v98 = vpop.f32.mrf.mxu0
    %v99 = vadd.f32 %v58, %v98
    %100 = vmatmul.f32.gmra.mxu0 %v32
    %v101 = vpop.f32.mrf.mxu0
    %v102 = vadd.f32 %v58, %v101
    %103 = vmatmul.f32.gmra.mxu0 %v33
    %v104 = vpop.f32.mrf.mxu0
    %v105 = vadd.f32 %v58, %v104
    %106 = vmatmul.f32.gmra.mxu0 %v34
    %v107 = vpop.f32.mrf.mxu0
    %v108 = vadd.f32 %v58, %v107
    %109 = vmatmul.f32.gmra.mxu0 %v35
    %v110 = vpop.f32.mrf.mxu0
    %v111 = vadd.f32 %v58, %v110
    %112 = vmatmul.f32.gmra.mxu0 %v36
    %v113 = vpop.f32.mrf.mxu0
    %v114 = vadd.f32 %v58, %v113
    %115 = vmatmul.f32.gmra.mxu0 %v37
    %v116 = vpop.f32.mrf.mxu0
    %v117 = vadd.f32 %v58, %v116
    %118 = vmatmul.f32.gmra.mxu0 %v38
    %v119 = vpop.f32.mrf.mxu0
    %v120 = vadd.f32 %v58, %v119
    %121 = vmatmul.f32.gmra.mxu0 %v39
    %v122 = vpop.f32.mrf.mxu0
    %v123 = vadd.f32 %v58, %v122
    %124 = vdwg.mxu0
    %v125 = vld [vmem:[%s3] sm:$0xff]
    %v126 = vld [vmem:[%s3 + $0x8] sm:$0xff]
    %v127 = vld [vmem:[%s3 + $0x10] sm:$0xff]
    %v128 = vld [vmem:[%s3 + $0x18] sm:$0xff]
    %129 = vmatpush.msra.mxu0 %v123
    %130 = vmatpush.msra.mxu0 %v120
    %131 = vmatpush.msra.mxu0 %v117
    %132 = vmatpush.msra.mxu0 %v114
    %133 = vmatpush.msra.mxu0 %v111
    %134 = vmatpush.msra.mxu0 %v108
    %135 = vmatpush.msra.mxu0 %v105
    %136 = vmatpush.msra.mxu0 %v102
    %137 = vmatpush.msra.mxu0 %v99
    %138 = vmatpush.msra.mxu0 %v96
    %139 = vmatpush.msra.mxu0 %v93
    %140 = vmatpush.msra.mxu0 %v90
    %141 = vmatpush.msra.mxu0 %v87
    %142 = vmatpush.msra.mxu0 %v84
    %143 = vmatpush.msra.mxu0 %v81
    %144 = vmatpush.msra.mxu0 %v78
    %145 = vmatmul.f32.gmra.mxu0 %v125
    %v146 = vpop.f32.mrf.mxu0
    %v147 = vadd.f32 0.0, %v146
    %148 = vmatmul.f32.gmra.mxu0 %v126
    %v149 = vpop.f32.mrf.mxu0
    %v150 = vadd.f32 0.0, %v149
    %151 = vmatmul.f32.gmra.mxu0 %v127
    %v152 = vpop.f32.mrf.mxu0
    %v153 = vadd.f32 0.0, %v152
    %154 = vmatmul.f32.gmra.mxu0 %v128
    %v155 = vpop.f32.mrf.mxu0
    %v156 = vadd.f32 0.0, %v155
    %157 = vdwg.mxu0
    %v158 = vld [vmem:[%s4] sm:$0xff]
    %v159 = vld [vmem:[%s4 + $0x8] sm:$0xff]
    %v160 = vld [vmem:[%s4 + $0x10] sm:$0xff]
    %v161 = vld [vmem:[%s4 + $0x18] sm:$0xff]
    %v162 = vld [vmem:[%s4 + $0x20] sm:$0xff]
    %v163 = vld [vmem:[%s4 + $0x28] sm:$0xff]
    %v164 = vld [vmem:[%s4 + $0x30] sm:$0xff]
    %v165 = vld [vmem:[%s4 + $0x38] sm:$0xff]
    %v166 = vld [vmem:[%s4 + $0x40] sm:$0xff]
    %v167 = vld [vmem:[%s4 + $0x48] sm:$0xff]
    %v168 = vld [vmem:[%s4 + $0x50] sm:$0xff]
    %v169 = vld [vmem:[%s4 + $0x58] sm:$0xff]
    %v170 = vld [vmem:[%s4 + $0x60] sm:$0xff]
    %v171 = vld [vmem:[%s4 + $0x68] sm:$0xff]
    %v172 = vld [vmem:[%s4 + $0x70] sm:$0xff]
    %v173 = vld [vmem:[%s4 + $0x78] sm:$0xff]
    %s174 = scalar_lea.vmem %s3, 32
    %v175 = vld [vmem:[%s174] sm:$0xff]
    %v176 = vld [vmem:[%s174 + $0x8] sm:$0xff]
    %v177 = vld [vmem:[%s174 + $0x10] sm:$0xff]
    %v178 = vld [vmem:[%s174 + $0x18] sm:$0xff]
    %179 = vmatpush.msra.mxu0 %v123
    %180 = vmatpush.msra.mxu0 %v120
    %181 = vmatpush.msra.mxu0 %v117
    %182 = vmatpush.msra.mxu0 %v114
    %183 = vmatpush.msra.mxu0 %v111
    %184 = vmatpush.msra.mxu0 %v108
    %185 = vmatpush.msra.mxu0 %v105
    %186 = vmatpush.msra.mxu0 %v102
    %187 = vmatpush.msra.mxu0 %v99
    %188 = vmatpush.msra.mxu0 %v96
    %189 = vmatpush.msra.mxu0 %v93
    %190 = vmatpush.msra.mxu0 %v90
    %191 = vmatpush.msra.mxu0 %v87
    %192 = vmatpush.msra.mxu0 %v84
    %193 = vmatpush.msra.mxu0 %v81
    %194 = vmatpush.msra.mxu0 %v78
    %195 = vmatmul.f32.gmra.mxu0 %v175
    %v196 = vpop.f32.mrf.mxu0
    %v197 = vadd.f32 0.0, %v196
    %198 = vmatmul.f32.gmra.mxu0 %v176
    %v199 = vpop.f32.mrf.mxu0
    %v200 = vadd.f32 0.0, %v199
    %201 = vmatmul.f32.gmra.mxu0 %v177
    %v202 = vpop.f32.mrf.mxu0
    %v203 = vadd.f32 0.0, %v202
    %204 = vmatmul.f32.gmra.mxu0 %v178
    %v205 = vpop.f32.mrf.mxu0
    %v206 = vadd.f32 0.0, %v205
    %207 = vdwg.mxu0
    %s208 = scalar_lea.vmem %s4, 128
    %v209 = vld [vmem:[%s208] sm:$0xff]
    %v210 = vld [vmem:[%s208 + $0x8] sm:$0xff]
    %v211 = vld [vmem:[%s208 + $0x10] sm:$0xff]
    %v212 = vld [vmem:[%s208 + $0x18] sm:$0xff]
    %v213 = vld [vmem:[%s208 + $0x20] sm:$0xff]
    %v214 = vld [vmem:[%s208 + $0x28] sm:$0xff]
    %v215 = vld [vmem:[%s208 + $0x30] sm:$0xff]
    %v216 = vld [vmem:[%s208 + $0x38] sm:$0xff]
    %v217 = vld [vmem:[%s208 + $0x40] sm:$0xff]
    %v218 = vld [vmem:[%s208 + $0x48] sm:$0xff]
    %v219 = vld [vmem:[%s208 + $0x50] sm:$0xff]
    %v220 = vld [vmem:[%s208 + $0x58] sm:$0xff]
    %v221 = vld [vmem:[%s208 + $0x60] sm:$0xff]
    %v222 = vld [vmem:[%s208 + $0x68] sm:$0xff]
    %v223 = vld [vmem:[%s208 + $0x70] sm:$0xff]
    %v224 = vld [vmem:[%s208 + $0x78] sm:$0xff]
    %225 = vmatpush.msra.mxu0 %v224
    %226 = vmatpush.msra.mxu0 %v223
    %227 = vmatpush.msra.mxu0 %v222
    %228 = vmatpush.msra.mxu0 %v221
    %229 = vmatpush.msra.mxu0 %v220
    %230 = vmatpush.msra.mxu0 %v219
    %231 = vmatpush.msra.mxu0 %v218
    %232 = vmatpush.msra.mxu0 %v217
    %233 = vmatpush.msra.mxu0 %v216
    %234 = vmatpush.msra.mxu0 %v215
    %235 = vmatpush.msra.mxu0 %v214
    %236 = vmatpush.msra.mxu0 %v213
    %237 = vmatpush.msra.mxu0 %v212
    %238 = vmatpush.msra.mxu0 %v211
    %239 = vmatpush.msra.mxu0 %v210
    %240 = vmatpush.msra.mxu0 %v209
    %241 = vmatmul.f32.gmra.mxu0 %v197
    %v242 = vpop.f32.mrf.mxu0
    %v243 = vadd.f32 0.0, %v242
    %244 = vmatmul.f32.gmra.mxu0 %v200
    %v245 = vpop.f32.mrf.mxu0
    %v246 = vadd.f32 0.0, %v245
    %247 = vmatmul.f32.gmra.mxu0 %v203
    %v248 = vpop.f32.mrf.mxu0
    %v249 = vadd.f32 0.0, %v248
    %250 = vmatmul.f32.gmra.mxu0 %v206
    %v251 = vpop.f32.mrf.mxu0
    %v252 = vadd.f32 0.0, %v251
    %253 = vdwg.mxu0
    %254 = vmatpush.msra.mxu0 %v173
    %255 = vmatpush.msra.mxu0 %v172
    %256 = vmatpush.msra.mxu0 %v171
    %257 = vmatpush.msra.mxu0 %v170
    %258 = vmatpush.msra.mxu0 %v169
    %259 = vmatpush.msra.mxu0 %v168
    %260 = vmatpush.msra.mxu0 %v167
    %261 = vmatpush.msra.mxu0 %v166
    %262 = vmatpush.msra.mxu0 %v165
    %263 = vmatpush.msra.mxu0 %v164
    %264 = vmatpush.msra.mxu0 %v163
    %265 = vmatpush.msra.mxu0 %v162
    %266 = vmatpush.msra.mxu0 %v161
    %267 = vmatpush.msra.mxu0 %v160
    %268 = vmatpush.msra.mxu0 %v159
    %269 = vmatpush.msra.mxu0 %v158
    %270 = vmatmul.f32.gmra.mxu0 %v147
    %v271 = vpop.f32.mrf.mxu0
    %v272 = vadd.f32 %v243, %v271
    %273 = vmatmul.f32.gmra.mxu0 %v150
    %v274 = vpop.f32.mrf.mxu0
    %v275 = vadd.f32 %v246, %v274
    %276 = vmatmul.f32.gmra.mxu0 %v153
    %v277 = vpop.f32.mrf.mxu0
    %v278 = vadd.f32 %v249, %v277
    %279 = vmatmul.f32.gmra.mxu0 %v156
    %v280 = vpop.f32.mrf.mxu0
    %v281 = vadd.f32 %v252, %v280
    %282 = vdwg.mxu0
    %s283 = scalar_lea.vmem %s3, 64
    %v284 = vld [vmem:[%s283] sm:$0xff]
    %v285 = vld [vmem:[%s283 + $0x8] sm:$0xff]
    %v286 = vld [vmem:[%s283 + $0x10] sm:$0xff]
    %v287 = vld [vmem:[%s283 + $0x18] sm:$0xff]
    %288 = vmatpush.msra.mxu0 %v123
    %289 = vmatpush.msra.mxu0 %v120
    %290 = vmatpush.msra.mxu0 %v117
    %291 = vmatpush.msra.mxu0 %v114
    %292 = vmatpush.msra.mxu0 %v111
    %293 = vmatpush.msra.mxu0 %v108
    %294 = vmatpush.msra.mxu0 %v105
    %295 = vmatpush.msra.mxu0 %v102
    %296 = vmatpush.msra.mxu0 %v99
    %297 = vmatpush.msra.mxu0 %v96
    %298 = vmatpush.msra.mxu0 %v93
    %299 = vmatpush.msra.mxu0 %v90
    %300 = vmatpush.msra.mxu0 %v87
    %301 = vmatpush.msra.mxu0 %v84
    %302 = vmatpush.msra.mxu0 %v81
    %303 = vmatpush.msra.mxu0 %v78
    %304 = vmatmul.f32.gmra.mxu0 %v284
    %v305 = vpop.f32.mrf.mxu0
    %v306 = vadd.f32 0.0, %v305
    %307 = vmatmul.f32.gmra.mxu0 %v285
    %v308 = vpop.f32.mrf.mxu0
    %v309 = vadd.f32 0.0, %v308
    %310 = vmatmul.f32.gmra.mxu0 %v286
    %v311 = vpop.f32.mrf.mxu0
    %v312 = vadd.f32 0.0, %v311
    %313 = vmatmul.f32.gmra.mxu0 %v287
    %v314 = vpop.f32.mrf.mxu0
    %v315 = vadd.f32 0.0, %v314
    %316 = vdwg.mxu0
    %s317 = scalar_lea.vmem %s4, 256
    %v318 = vld [vmem:[%s317] sm:$0xff]
    %v319 = vld [vmem:[%s317 + $0x8] sm:$0xff]
    %v320 = vld [vmem:[%s317 + $0x10] sm:$0xff]
    %v321 = vld [vmem:[%s317 + $0x18] sm:$0xff]
    %v322 = vld [vmem:[%s317 + $0x20] sm:$0xff]
    %v323 = vld [vmem:[%s317 + $0x28] sm:$0xff]
    %v324 = vld [vmem:[%s317 + $0x30] sm:$0xff]
    %v325 = vld [vmem:[%s317 + $0x38] sm:$0xff]
    %v326 = vld [vmem:[%s317 + $0x40] sm:$0xff]
    %v327 = vld [vmem:[%s317 + $0x48] sm:$0xff]
    %v328 = vld [vmem:[%s317 + $0x50] sm:$0xff]
    %v329 = vld [vmem:[%s317 + $0x58] sm:$0xff]
    %v330 = vld [vmem:[%s317 + $0x60] sm:$0xff]
    %v331 = vld [vmem:[%s317 + $0x68] sm:$0xff]
    %v332 = vld [vmem:[%s317 + $0x70] sm:$0xff]
    %v333 = vld [vmem:[%s317 + $0x78] sm:$0xff]
    %334 = vmatpush.msra.mxu0 %v333
    %335 = vmatpush.msra.mxu0 %v332
    %336 = vmatpush.msra.mxu0 %v331
    %337 = vmatpush.msra.mxu0 %v330
    %338 = vmatpush.msra.mxu0 %v329
    %339 = vmatpush.msra.mxu0 %v328
    %340 = vmatpush.msra.mxu0 %v327
    %341 = vmatpush.msra.mxu0 %v326
    %342 = vmatpush.msra.mxu0 %v325
    %343 = vmatpush.msra.mxu0 %v324
    %344 = vmatpush.msra.mxu0 %v323
    %345 = vmatpush.msra.mxu0 %v322
    %346 = vmatpush.msra.mxu0 %v321
    %347 = vmatpush.msra.mxu0 %v320
    %348 = vmatpush.msra.mxu0 %v319
    %349 = vmatpush.msra.mxu0 %v318
    %350 = vmatmul.f32.gmra.mxu0 %v306
    %v351 = vpop.f32.mrf.mxu0
    %v352 = vadd.f32 0.0, %v351
    %353 = vmatmul.f32.gmra.mxu0 %v309
    %v354 = vpop.f32.mrf.mxu0
    %v355 = vadd.f32 0.0, %v354
    %356 = vmatmul.f32.gmra.mxu0 %v312
    %v357 = vpop.f32.mrf.mxu0
    %v358 = vadd.f32 0.0, %v357
    %359 = vmatmul.f32.gmra.mxu0 %v315
    %v360 = vpop.f32.mrf.mxu0
    %v361 = vadd.f32 0.0, %v360
    %362 = vdwg.mxu0
    %v363 = vadd.f32 %v272, %v352
    %v364 = vadd.f32 %v275, %v355
    %v365 = vadd.f32 %v278, %v358
    %v366 = vadd.f32 %v281, %v361
    %s367 = scalar_lea.vmem %s3, 96
    %v368 = vld [vmem:[%s367] sm:$0xff]
    %v369 = vld [vmem:[%s367 + $0x8] sm:$0xff]
    %v370 = vld [vmem:[%s367 + $0x10] sm:$0xff]
    %v371 = vld [vmem:[%s367 + $0x18] sm:$0xff]
    %372 = vmatpush.msra.mxu0 %v123
    %373 = vmatpush.msra.mxu0 %v120
    %374 = vmatpush.msra.mxu0 %v117
    %375 = vmatpush.msra.mxu0 %v114
    %376 = vmatpush.msra.mxu0 %v111
    %377 = vmatpush.msra.mxu0 %v108
    %378 = vmatpush.msra.mxu0 %v105
    %379 = vmatpush.msra.mxu0 %v102
    %380 = vmatpush.msra.mxu0 %v99
    %381 = vmatpush.msra.mxu0 %v96
    %382 = vmatpush.msra.mxu0 %v93
    %383 = vmatpush.msra.mxu0 %v90
    %384 = vmatpush.msra.mxu0 %v87
    %385 = vmatpush.msra.mxu0 %v84
    %386 = vmatpush.msra.mxu0 %v81
    %387 = vmatpush.msra.mxu0 %v78
    %388 = vmatmul.f32.gmra.mxu0 %v368
    %v389 = vpop.f32.mrf.mxu0
    %v390 = vadd.f32 0.0, %v389
    %391 = vmatmul.f32.gmra.mxu0 %v369
    %v392 = vpop.f32.mrf.mxu0
    %v393 = vadd.f32 0.0, %v392
    %394 = vmatmul.f32.gmra.mxu0 %v370
    %v395 = vpop.f32.mrf.mxu0
    %v396 = vadd.f32 0.0, %v395
    %397 = vmatmul.f32.gmra.mxu0 %v371
    %v398 = vpop.f32.mrf.mxu0
    %v399 = vadd.f32 0.0, %v398
    %400 = vdwg.mxu0
    %s401 = scalar_lea.vmem %s4, 384
    %v402 = vld [vmem:[%s401] sm:$0xff]
    %v403 = vld [vmem:[%s401 + $0x8] sm:$0xff]
    %v404 = vld [vmem:[%s401 + $0x10] sm:$0xff]
    %v405 = vld [vmem:[%s401 + $0x18] sm:$0xff]
    %v406 = vld [vmem:[%s401 + $0x20] sm:$0xff]
    %v407 = vld [vmem:[%s401 + $0x28] sm:$0xff]
    %v408 = vld [vmem:[%s401 + $0x30] sm:$0xff]
    %v409 = vld [vmem:[%s401 + $0x38] sm:$0xff]
    %v410 = vld [vmem:[%s401 + $0x40] sm:$0xff]
    %v411 = vld [vmem:[%s401 + $0x48] sm:$0xff]
    %v412 = vld [vmem:[%s401 + $0x50] sm:$0xff]
    %v413 = vld [vmem:[%s401 + $0x58] sm:$0xff]
    %v414 = vld [vmem:[%s401 + $0x60] sm:$0xff]
    %v415 = vld [vmem:[%s401 + $0x68] sm:$0xff]
    %v416 = vld [vmem:[%s401 + $0x70] sm:$0xff]
    %v417 = vld [vmem:[%s401 + $0x78] sm:$0xff]
    %418 = vmatpush.msra.mxu0 %v417
    %419 = vmatpush.msra.mxu0 %v416
    %420 = vmatpush.msra.mxu0 %v415
    %421 = vmatpush.msra.mxu0 %v414
    %422 = vmatpush.msra.mxu0 %v413
    %423 = vmatpush.msra.mxu0 %v412
    %424 = vmatpush.msra.mxu0 %v411
    %425 = vmatpush.msra.mxu0 %v410
    %426 = vmatpush.msra.mxu0 %v409
    %427 = vmatpush.msra.mxu0 %v408
    %428 = vmatpush.msra.mxu0 %v407
    %429 = vmatpush.msra.mxu0 %v406
    %430 = vmatpush.msra.mxu0 %v405
    %431 = vmatpush.msra.mxu0 %v404
    %432 = vmatpush.msra.mxu0 %v403
    %433 = vmatpush.msra.mxu0 %v402
    %434 = vmatmul.f32.gmra.mxu0 %v390
    %v435 = vpop.f32.mrf.mxu0
    %v436 = vadd.f32 0.0, %v435
    %437 = vmatmul.f32.gmra.mxu0 %v393
    %v438 = vpop.f32.mrf.mxu0
    %v439 = vadd.f32 0.0, %v438
    %440 = vmatmul.f32.gmra.mxu0 %v396
    %v441 = vpop.f32.mrf.mxu0
    %v442 = vadd.f32 0.0, %v441
    %443 = vmatmul.f32.gmra.mxu0 %v399
    %v444 = vpop.f32.mrf.mxu0
    %v445 = vadd.f32 0.0, %v444
    %446 = vdwg.mxu0
    %v447 = vadd.f32 %v363, %v436
    %v448 = vadd.f32 %v364, %v439
    %v449 = vadd.f32 %v365, %v442
    %v450 = vadd.f32 %v366, %v445
    %s451 = scalar_lea.vmem %s3, 128
    %v452 = vld [vmem:[%s451] sm:$0xff]
    %v453 = vld [vmem:[%s451 + $0x8] sm:$0xff]
    %v454 = vld [vmem:[%s451 + $0x10] sm:$0xff]
    %v455 = vld [vmem:[%s451 + $0x18] sm:$0xff]
    %456 = vmatpush.msra.mxu0 %v123
    %457 = vmatpush.msra.mxu0 %v120
    %458 = vmatpush.msra.mxu0 %v117
    %459 = vmatpush.msra.mxu0 %v114
    %460 = vmatpush.msra.mxu0 %v111
    %461 = vmatpush.msra.mxu0 %v108
    %462 = vmatpush.msra.mxu0 %v105
    %463 = vmatpush.msra.mxu0 %v102
    %464 = vmatpush.msra.mxu0 %v99
    %465 = vmatpush.msra.mxu0 %v96
    %466 = vmatpush.msra.mxu0 %v93
    %467 = vmatpush.msra.mxu0 %v90
    %468 = vmatpush.msra.mxu0 %v87
    %469 = vmatpush.msra.mxu0 %v84
    %470 = vmatpush.msra.mxu0 %v81
    %471 = vmatpush.msra.mxu0 %v78
    %472 = vmatmul.f32.gmra.mxu0 %v452
    %v473 = vpop.f32.mrf.mxu0
    %v474 = vadd.f32 0.0, %v473
    %475 = vmatmul.f32.gmra.mxu0 %v453
    %v476 = vpop.f32.mrf.mxu0
    %v477 = vadd.f32 0.0, %v476
    %478 = vmatmul.f32.gmra.mxu0 %v454
    %v479 = vpop.f32.mrf.mxu0
    %v480 = vadd.f32 0.0, %v479
    %481 = vmatmul.f32.gmra.mxu0 %v455
    %v482 = vpop.f32.mrf.mxu0
    %v483 = vadd.f32 0.0, %v482
    %484 = vdwg.mxu0
    %s485 = scalar_lea.vmem %s4, 512
    %v486 = vld [vmem:[%s485] sm:$0xff]
    %v487 = vld [vmem:[%s485 + $0x8] sm:$0xff]
    %v488 = vld [vmem:[%s485 + $0x10] sm:$0xff]
    %v489 = vld [vmem:[%s485 + $0x18] sm:$0xff]
    %v490 = vld [vmem:[%s485 + $0x20] sm:$0xff]
    %v491 = vld [vmem:[%s485 + $0x28] sm:$0xff]
    %v492 = vld [vmem:[%s485 + $0x30] sm:$0xff]
    %v493 = vld [vmem:[%s485 + $0x38] sm:$0xff]
    %v494 = vld [vmem:[%s485 + $0x40] sm:$0xff]
    %v495 = vld [vmem:[%s485 + $0x48] sm:$0xff]
    %v496 = vld [vmem:[%s485 + $0x50] sm:$0xff]
    %v497 = vld [vmem:[%s485 + $0x58] sm:$0xff]
    %v498 = vld [vmem:[%s485 + $0x60] sm:$0xff]
    %v499 = vld [vmem:[%s485 + $0x68] sm:$0xff]
    %v500 = vld [vmem:[%s485 + $0x70] sm:$0xff]
    %v501 = vld [vmem:[%s485 + $0x78] sm:$0xff]
    %502 = vmatpush.msra.mxu0 %v501
    %503 = vmatpush.msra.mxu0 %v500
    %504 = vmatpush.msra.mxu0 %v499
    %505 = vmatpush.msra.mxu0 %v498
    %506 = vmatpush.msra.mxu0 %v497
    %507 = vmatpush.msra.mxu0 %v496
    %508 = vmatpush.msra.mxu0 %v495
    %509 = vmatpush.msra.mxu0 %v494
    %510 = vmatpush.msra.mxu0 %v493
    %511 = vmatpush.msra.mxu0 %v492
    %512 = vmatpush.msra.mxu0 %v491
    %513 = vmatpush.msra.mxu0 %v490
    %514 = vmatpush.msra.mxu0 %v489
    %515 = vmatpush.msra.mxu0 %v488
    %516 = vmatpush.msra.mxu0 %v487
    %517 = vmatpush.msra.mxu0 %v486
    %518 = vmatmul.f32.gmra.mxu0 %v474
    %v519 = vpop.f32.mrf.mxu0
    %v520 = vadd.f32 0.0, %v519
    %521 = vmatmul.f32.gmra.mxu0 %v477
    %v522 = vpop.f32.mrf.mxu0
    %v523 = vadd.f32 0.0, %v522
    %524 = vmatmul.f32.gmra.mxu0 %v480
    %v525 = vpop.f32.mrf.mxu0
    %v526 = vadd.f32 0.0, %v525
    %527 = vmatmul.f32.gmra.mxu0 %v483
    %v528 = vpop.f32.mrf.mxu0
    %v529 = vadd.f32 0.0, %v528
    %530 = vdwg.mxu0
    %v531 = vadd.f32 %v447, %v520
    %v532 = vadd.f32 %v448, %v523
    %v533 = vadd.f32 %v449, %v526
    %v534 = vadd.f32 %v450, %v529
    %s535 = scalar_lea.vmem %s3, 160
    %v536 = vld [vmem:[%s535] sm:$0xff]
    %v537 = vld [vmem:[%s535 + $0x8] sm:$0xff]
    %v538 = vld [vmem:[%s535 + $0x10] sm:$0xff]
    %v539 = vld [vmem:[%s535 + $0x18] sm:$0xff]
    %540 = vmatpush.msra.mxu0 %v123
    %541 = vmatpush.msra.mxu0 %v120
    %542 = vmatpush.msra.mxu0 %v117
    %543 = vmatpush.msra.mxu0 %v114
    %544 = vmatpush.msra.mxu0 %v111
    %545 = vmatpush.msra.mxu0 %v108
    %546 = vmatpush.msra.mxu0 %v105
    %547 = vmatpush.msra.mxu0 %v102
    %548 = vmatpush.msra.mxu0 %v99
    %549 = vmatpush.msra.mxu0 %v96
    %550 = vmatpush.msra.mxu0 %v93
    %551 = vmatpush.msra.mxu0 %v90
    %552 = vmatpush.msra.mxu0 %v87
    %553 = vmatpush.msra.mxu0 %v84
    %554 = vmatpush.msra.mxu0 %v81
    %555 = vmatpush.msra.mxu0 %v78
    %556 = vmatmul.f32.gmra.mxu0 %v536
    %v557 = vpop.f32.mrf.mxu0
    %v558 = vadd.f32 0.0, %v557
    %559 = vmatmul.f32.gmra.mxu0 %v537
    %v560 = vpop.f32.mrf.mxu0
    %v561 = vadd.f32 0.0, %v560
    %562 = vmatmul.f32.gmra.mxu0 %v538
    %v563 = vpop.f32.mrf.mxu0
    %v564 = vadd.f32 0.0, %v563
    %565 = vmatmul.f32.gmra.mxu0 %v539
    %v566 = vpop.f32.mrf.mxu0
    %v567 = vadd.f32 0.0, %v566
    %568 = vdwg.mxu0
    %s569 = scalar_lea.vmem %s4, 640
    %v570 = vld [vmem:[%s569] sm:$0xff]
    %v571 = vld [vmem:[%s569 + $0x8] sm:$0xff]
    %v572 = vld [vmem:[%s569 + $0x10] sm:$0xff]
    %v573 = vld [vmem:[%s569 + $0x18] sm:$0xff]
    %v574 = vld [vmem:[%s569 + $0x20] sm:$0xff]
    %v575 = vld [vmem:[%s569 + $0x28] sm:$0xff]
    %v576 = vld [vmem:[%s569 + $0x30] sm:$0xff]
    %v577 = vld [vmem:[%s569 + $0x38] sm:$0xff]
    %v578 = vld [vmem:[%s569 + $0x40] sm:$0xff]
    %v579 = vld [vmem:[%s569 + $0x48] sm:$0xff]
    %v580 = vld [vmem:[%s569 + $0x50] sm:$0xff]
    %v581 = vld [vmem:[%s569 + $0x58] sm:$0xff]
    %v582 = vld [vmem:[%s569 + $0x60] sm:$0xff]
    %v583 = vld [vmem:[%s569 + $0x68] sm:$0xff]
    %v584 = vld [vmem:[%s569 + $0x70] sm:$0xff]
    %v585 = vld [vmem:[%s569 + $0x78] sm:$0xff]
    %586 = vmatpush.msra.mxu0 %v585
    %587 = vmatpush.msra.mxu0 %v584
    %588 = vmatpush.msra.mxu0 %v583
    %589 = vmatpush.msra.mxu0 %v582
    %590 = vmatpush.msra.mxu0 %v581
    %591 = vmatpush.msra.mxu0 %v580
    %592 = vmatpush.msra.mxu0 %v579
    %593 = vmatpush.msra.mxu0 %v578
    %594 = vmatpush.msra.mxu0 %v577
    %595 = vmatpush.msra.mxu0 %v576
    %596 = vmatpush.msra.mxu0 %v575
    %597 = vmatpush.msra.mxu0 %v574
    %598 = vmatpush.msra.mxu0 %v573
    %599 = vmatpush.msra.mxu0 %v572
    %600 = vmatpush.msra.mxu0 %v571
    %601 = vmatpush.msra.mxu0 %v570
    %602 = vmatmul.f32.gmra.mxu0 %v558
    %v603 = vpop.f32.mrf.mxu0
    %v604 = vadd.f32 0.0, %v603
    %605 = vmatmul.f32.gmra.mxu0 %v561
    %v606 = vpop.f32.mrf.mxu0
    %v607 = vadd.f32 0.0, %v606
    %608 = vmatmul.f32.gmra.mxu0 %v564
    %v609 = vpop.f32.mrf.mxu0
    %v610 = vadd.f32 0.0, %v609
    %611 = vmatmul.f32.gmra.mxu0 %v567
    %v612 = vpop.f32.mrf.mxu0
    %v613 = vadd.f32 0.0, %v612
    %614 = vdwg.mxu0
    %v615 = vadd.f32 %v531, %v604
    %v616 = vadd.f32 %v532, %v607
    %v617 = vadd.f32 %v533, %v610
    %v618 = vadd.f32 %v534, %v613
    %s619 = scalar_lea.vmem %s3, 192
    %v620 = vld [vmem:[%s619] sm:$0xff]
    %v621 = vld [vmem:[%s619 + $0x8] sm:$0xff]
    %v622 = vld [vmem:[%s619 + $0x10] sm:$0xff]
    %v623 = vld [vmem:[%s619 + $0x18] sm:$0xff]
    %624 = vmatpush.msra.mxu0 %v123
    %625 = vmatpush.msra.mxu0 %v120
    %626 = vmatpush.msra.mxu0 %v117
    %627 = vmatpush.msra.mxu0 %v114
    %628 = vmatpush.msra.mxu0 %v111
    %629 = vmatpush.msra.mxu0 %v108
    %630 = vmatpush.msra.mxu0 %v105
    %631 = vmatpush.msra.mxu0 %v102
    %632 = vmatpush.msra.mxu0 %v99
    %633 = vmatpush.msra.mxu0 %v96
    %634 = vmatpush.msra.mxu0 %v93
    %635 = vmatpush.msra.mxu0 %v90
    %636 = vmatpush.msra.mxu0 %v87
    %637 = vmatpush.msra.mxu0 %v84
    %638 = vmatpush.msra.mxu0 %v81
    %639 = vmatpush.msra.mxu0 %v78
    %640 = vmatmul.f32.gmra.mxu0 %v620
    %v641 = vpop.f32.mrf.mxu0
    %v642 = vadd.f32 0.0, %v641
    %643 = vmatmul.f32.gmra.mxu0 %v621
    %v644 = vpop.f32.mrf.mxu0
    %v645 = vadd.f32 0.0, %v644
    %646 = vmatmul.f32.gmra.mxu0 %v622
    %v647 = vpop.f32.mrf.mxu0
    %v648 = vadd.f32 0.0, %v647
    %649 = vmatmul.f32.gmra.mxu0 %v623
    %v650 = vpop.f32.mrf.mxu0
    %v651 = vadd.f32 0.0, %v650
    %652 = vdwg.mxu0
    %s653 = scalar_lea.vmem %s4, 768
    %v654 = vld [vmem:[%s653] sm:$0xff]
    %v655 = vld [vmem:[%s653 + $0x8] sm:$0xff]
    %v656 = vld [vmem:[%s653 + $0x10] sm:$0xff]
    %v657 = vld [vmem:[%s653 + $0x18] sm:$0xff]
    %v658 = vld [vmem:[%s653 + $0x20] sm:$0xff]
    %v659 = vld [vmem:[%s653 + $0x28] sm:$0xff]
    %v660 = vld [vmem:[%s653 + $0x30] sm:$0xff]
    %v661 = vld [vmem:[%s653 + $0x38] sm:$0xff]
    %v662 = vld [vmem:[%s653 + $0x40] sm:$0xff]
    %v663 = vld [vmem:[%s653 + $0x48] sm:$0xff]
    %v664 = vld [vmem:[%s653 + $0x50] sm:$0xff]
    %v665 = vld [vmem:[%s653 + $0x58] sm:$0xff]
    %v666 = vld [vmem:[%s653 + $0x60] sm:$0xff]
    %v667 = vld [vmem:[%s653 + $0x68] sm:$0xff]
    %v668 = vld [vmem:[%s653 + $0x70] sm:$0xff]
    %v669 = vld [vmem:[%s653 + $0x78] sm:$0xff]
    %670 = vmatpush.msra.mxu0 %v669
    %671 = vmatpush.msra.mxu0 %v668
    %672 = vmatpush.msra.mxu0 %v667
    %673 = vmatpush.msra.mxu0 %v666
    %674 = vmatpush.msra.mxu0 %v665
    %675 = vmatpush.msra.mxu0 %v664
    %676 = vmatpush.msra.mxu0 %v663
    %677 = vmatpush.msra.mxu0 %v662
    %678 = vmatpush.msra.mxu0 %v661
    %679 = vmatpush.msra.mxu0 %v660
    %680 = vmatpush.msra.mxu0 %v659
    %681 = vmatpush.msra.mxu0 %v658
    %682 = vmatpush.msra.mxu0 %v657
    %683 = vmatpush.msra.mxu0 %v656
    %684 = vmatpush.msra.mxu0 %v655
    %685 = vmatpush.msra.mxu0 %v654
    %686 = vmatmul.f32.gmra.mxu0 %v642
    %v687 = vpop.f32.mrf.mxu0
    %v688 = vadd.f32 0.0, %v687
    %689 = vmatmul.f32.gmra.mxu0 %v645
    %v690 = vpop.f32.mrf.mxu0
    %v691 = vadd.f32 0.0, %v690
    %692 = vmatmul.f32.gmra.mxu0 %v648
    %v693 = vpop.f32.mrf.mxu0
    %v694 = vadd.f32 0.0, %v693
    %695 = vmatmul.f32.gmra.mxu0 %v651
    %v696 = vpop.f32.mrf.mxu0
    %v697 = vadd.f32 0.0, %v696
    %698 = vdwg.mxu0
    %v699 = vadd.f32 %v615, %v688
    %v700 = vadd.f32 %v616, %v691
    %v701 = vadd.f32 %v617, %v694
    %v702 = vadd.f32 %v618, %v697
    %s703 = scalar_lea.vmem %s3, 224
    %v704 = vld [vmem:[%s703] sm:$0xff]
    %v705 = vld [vmem:[%s703 + $0x8] sm:$0xff]
    %v706 = vld [vmem:[%s703 + $0x10] sm:$0xff]
    %v707 = vld [vmem:[%s703 + $0x18] sm:$0xff]
    %708 = vmatpush.msra.mxu0 %v123
    %709 = vmatpush.msra.mxu0 %v120
    %710 = vmatpush.msra.mxu0 %v117
    %711 = vmatpush.msra.mxu0 %v114
    %712 = vmatpush.msra.mxu0 %v111
    %713 = vmatpush.msra.mxu0 %v108
    %714 = vmatpush.msra.mxu0 %v105
    %715 = vmatpush.msra.mxu0 %v102
    %716 = vmatpush.msra.mxu0 %v99
    %717 = vmatpush.msra.mxu0 %v96
    %718 = vmatpush.msra.mxu0 %v93
    %719 = vmatpush.msra.mxu0 %v90
    %720 = vmatpush.msra.mxu0 %v87
    %721 = vmatpush.msra.mxu0 %v84
    %722 = vmatpush.msra.mxu0 %v81
    %723 = vmatpush.msra.mxu0 %v78
    %724 = vmatmul.f32.gmra.mxu0 %v704
    %v725 = vpop.f32.mrf.mxu0
    %v726 = vadd.f32 0.0, %v725
    %727 = vmatmul.f32.gmra.mxu0 %v705
    %v728 = vpop.f32.mrf.mxu0
    %v729 = vadd.f32 0.0, %v728
    %730 = vmatmul.f32.gmra.mxu0 %v706
    %v731 = vpop.f32.mrf.mxu0
    %v732 = vadd.f32 0.0, %v731
    %733 = vmatmul.f32.gmra.mxu0 %v707
    %v734 = vpop.f32.mrf.mxu0
    %v735 = vadd.f32 0.0, %v734
    %736 = vdwg.mxu0
    %s737 = scalar_lea.vmem %s4, 896
    %v738 = vld [vmem:[%s737] sm:$0xff]
    %v739 = vld [vmem:[%s737 + $0x8] sm:$0xff]
    %v740 = vld [vmem:[%s737 + $0x10] sm:$0xff]
    %v741 = vld [vmem:[%s737 + $0x18] sm:$0xff]
    %v742 = vld [vmem:[%s737 + $0x20] sm:$0xff]
    %v743 = vld [vmem:[%s737 + $0x28] sm:$0xff]
    %v744 = vld [vmem:[%s737 + $0x30] sm:$0xff]
    %v745 = vld [vmem:[%s737 + $0x38] sm:$0xff]
    %v746 = vld [vmem:[%s737 + $0x40] sm:$0xff]
    %v747 = vld [vmem:[%s737 + $0x48] sm:$0xff]
    %v748 = vld [vmem:[%s737 + $0x50] sm:$0xff]
    %v749 = vld [vmem:[%s737 + $0x58] sm:$0xff]
    %v750 = vld [vmem:[%s737 + $0x60] sm:$0xff]
    %v751 = vld [vmem:[%s737 + $0x68] sm:$0xff]
    %v752 = vld [vmem:[%s737 + $0x70] sm:$0xff]
    %v753 = vld [vmem:[%s737 + $0x78] sm:$0xff]
    %754 = vmatpush.msra.mxu0 %v753
    %755 = vmatpush.msra.mxu0 %v752
    %756 = vmatpush.msra.mxu0 %v751
    %757 = vmatpush.msra.mxu0 %v750
    %758 = vmatpush.msra.mxu0 %v749
    %759 = vmatpush.msra.mxu0 %v748
    %760 = vmatpush.msra.mxu0 %v747
    %761 = vmatpush.msra.mxu0 %v746
    %762 = vmatpush.msra.mxu0 %v745
    %763 = vmatpush.msra.mxu0 %v744
    %764 = vmatpush.msra.mxu0 %v743
    %765 = vmatpush.msra.mxu0 %v742
    %766 = vmatpush.msra.mxu0 %v741
    %767 = vmatpush.msra.mxu0 %v740
    %768 = vmatpush.msra.mxu0 %v739
    %769 = vmatpush.msra.mxu0 %v738
    %770 = vmatmul.f32.gmra.mxu0 %v726
    %v771 = vpop.f32.mrf.mxu0
    %v772 = vadd.f32 0.0, %v771
    %773 = vmatmul.f32.gmra.mxu0 %v729
    %v774 = vpop.f32.mrf.mxu0
    %v775 = vadd.f32 0.0, %v774
    %776 = vmatmul.f32.gmra.mxu0 %v732
    %v777 = vpop.f32.mrf.mxu0
    %v778 = vadd.f32 0.0, %v777
    %779 = vmatmul.f32.gmra.mxu0 %v735
    %v780 = vpop.f32.mrf.mxu0
    %v781 = vadd.f32 0.0, %v780
    %782 = vdwg.mxu0
    %v783 = vadd.f32 %v699, %v772
    %v784 = vadd.f32 %v700, %v775
    %v785 = vadd.f32 %v701, %v778
    %v786 = vadd.f32 %v702, %v781
    %s787 = scalar_lea.vmem %s3, 256
    %v788 = vld [vmem:[%s787] sm:$0xff]
    %v789 = vld [vmem:[%s787 + $0x8] sm:$0xff]
    %v790 = vld [vmem:[%s787 + $0x10] sm:$0xff]
    %v791 = vld [vmem:[%s787 + $0x18] sm:$0xff]
    %792 = vmatpush.msra.mxu0 %v123
    %793 = vmatpush.msra.mxu0 %v120
    %794 = vmatpush.msra.mxu0 %v117
    %795 = vmatpush.msra.mxu0 %v114
    %796 = vmatpush.msra.mxu0 %v111
    %797 = vmatpush.msra.mxu0 %v108
    %798 = vmatpush.msra.mxu0 %v105
    %799 = vmatpush.msra.mxu0 %v102
    %800 = vmatpush.msra.mxu0 %v99
    %801 = vmatpush.msra.mxu0 %v96
    %802 = vmatpush.msra.mxu0 %v93
    %803 = vmatpush.msra.mxu0 %v90
    %804 = vmatpush.msra.mxu0 %v87
    %805 = vmatpush.msra.mxu0 %v84
    %806 = vmatpush.msra.mxu0 %v81
    %807 = vmatpush.msra.mxu0 %v78
    %808 = vmatmul.f32.gmra.mxu0 %v788
    %v809 = vpop.f32.mrf.mxu0
    %v810 = vadd.f32 0.0, %v809
    %811 = vmatmul.f32.gmra.mxu0 %v789
    %v812 = vpop.f32.mrf.mxu0
    %v813 = vadd.f32 0.0, %v812
    %814 = vmatmul.f32.gmra.mxu0 %v790
    %v815 = vpop.f32.mrf.mxu0
    %v816 = vadd.f32 0.0, %v815
    %817 = vmatmul.f32.gmra.mxu0 %v791
    %v818 = vpop.f32.mrf.mxu0
    %v819 = vadd.f32 0.0, %v818
    %820 = vdwg.mxu0
    %s821 = scalar_lea.vmem %s4, 1024
    %v822 = vld [vmem:[%s821] sm:$0xff]
    %v823 = vld [vmem:[%s821 + $0x8] sm:$0xff]
    %v824 = vld [vmem:[%s821 + $0x10] sm:$0xff]
    %v825 = vld [vmem:[%s821 + $0x18] sm:$0xff]
    %v826 = vld [vmem:[%s821 + $0x20] sm:$0xff]
    %v827 = vld [vmem:[%s821 + $0x28] sm:$0xff]
    %v828 = vld [vmem:[%s821 + $0x30] sm:$0xff]
    %v829 = vld [vmem:[%s821 + $0x38] sm:$0xff]
    %v830 = vld [vmem:[%s821 + $0x40] sm:$0xff]
    %v831 = vld [vmem:[%s821 + $0x48] sm:$0xff]
    %v832 = vld [vmem:[%s821 + $0x50] sm:$0xff]
    %v833 = vld [vmem:[%s821 + $0x58] sm:$0xff]
    %v834 = vld [vmem:[%s821 + $0x60] sm:$0xff]
    %v835 = vld [vmem:[%s821 + $0x68] sm:$0xff]
    %v836 = vld [vmem:[%s821 + $0x70] sm:$0xff]
    %v837 = vld [vmem:[%s821 + $0x78] sm:$0xff]
    %838 = vmatpush.msra.mxu0 %v837
    %839 = vmatpush.msra.mxu0 %v836
    %840 = vmatpush.msra.mxu0 %v835
    %841 = vmatpush.msra.mxu0 %v834
    %842 = vmatpush.msra.mxu0 %v833
    %843 = vmatpush.msra.mxu0 %v832
    %844 = vmatpush.msra.mxu0 %v831
    %845 = vmatpush.msra.mxu0 %v830
    %846 = vmatpush.msra.mxu0 %v829
    %847 = vmatpush.msra.mxu0 %v828
    %848 = vmatpush.msra.mxu0 %v827
    %849 = vmatpush.msra.mxu0 %v826
    %850 = vmatpush.msra.mxu0 %v825
    %851 = vmatpush.msra.mxu0 %v824
    %852 = vmatpush.msra.mxu0 %v823
    %853 = vmatpush.msra.mxu0 %v822
    %854 = vmatmul.f32.gmra.mxu0 %v810
    %v855 = vpop.f32.mrf.mxu0
    %v856 = vadd.f32 0.0, %v855
    %857 = vmatmul.f32.gmra.mxu0 %v813
    %v858 = vpop.f32.mrf.mxu0
    %v859 = vadd.f32 0.0, %v858
    %860 = vmatmul.f32.gmra.mxu0 %v816
    %v861 = vpop.f32.mrf.mxu0
    %v862 = vadd.f32 0.0, %v861
    %863 = vmatmul.f32.gmra.mxu0 %v819
    %v864 = vpop.f32.mrf.mxu0
    %v865 = vadd.f32 0.0, %v864
    %866 = vdwg.mxu0
    %v867 = vadd.f32 %v783, %v856
    %v868 = vadd.f32 %v784, %v859
    %v869 = vadd.f32 %v785, %v862
    %v870 = vadd.f32 %v786, %v865
    %s871 = scalar_lea.vmem %s3, 288
    %v872 = vld [vmem:[%s871] sm:$0xff]
    %v873 = vld [vmem:[%s871 + $0x8] sm:$0xff]
    %v874 = vld [vmem:[%s871 + $0x10] sm:$0xff]
    %v875 = vld [vmem:[%s871 + $0x18] sm:$0xff]
    %876 = vmatpush.msra.mxu0 %v123
    %877 = vmatpush.msra.mxu0 %v120
    %878 = vmatpush.msra.mxu0 %v117
    %879 = vmatpush.msra.mxu0 %v114
    %880 = vmatpush.msra.mxu0 %v111
    %881 = vmatpush.msra.mxu0 %v108
    %882 = vmatpush.msra.mxu0 %v105
    %883 = vmatpush.msra.mxu0 %v102
    %884 = vmatpush.msra.mxu0 %v99
    %885 = vmatpush.msra.mxu0 %v96
    %886 = vmatpush.msra.mxu0 %v93
    %887 = vmatpush.msra.mxu0 %v90
    %888 = vmatpush.msra.mxu0 %v87
    %889 = vmatpush.msra.mxu0 %v84
    %890 = vmatpush.msra.mxu0 %v81
    %891 = vmatpush.msra.mxu0 %v78
    %892 = vmatmul.f32.gmra.mxu0 %v872
    %v893 = vpop.f32.mrf.mxu0
    %v894 = vadd.f32 0.0, %v893
    %895 = vmatmul.f32.gmra.mxu0 %v873
    %v896 = vpop.f32.mrf.mxu0
    %v897 = vadd.f32 0.0, %v896
    %898 = vmatmul.f32.gmra.mxu0 %v874
    %v899 = vpop.f32.mrf.mxu0
    %v900 = vadd.f32 0.0, %v899
    %901 = vmatmul.f32.gmra.mxu0 %v875
    %v902 = vpop.f32.mrf.mxu0
    %v903 = vadd.f32 0.0, %v902
    %904 = vdwg.mxu0
    %s905 = scalar_lea.vmem %s4, 1152
    %v906 = vld [vmem:[%s905] sm:$0xff]
    %v907 = vld [vmem:[%s905 + $0x8] sm:$0xff]
    %v908 = vld [vmem:[%s905 + $0x10] sm:$0xff]
    %v909 = vld [vmem:[%s905 + $0x18] sm:$0xff]
    %v910 = vld [vmem:[%s905 + $0x20] sm:$0xff]
    %v911 = vld [vmem:[%s905 + $0x28] sm:$0xff]
    %v912 = vld [vmem:[%s905 + $0x30] sm:$0xff]
    %v913 = vld [vmem:[%s905 + $0x38] sm:$0xff]
    %v914 = vld [vmem:[%s905 + $0x40] sm:$0xff]
    %v915 = vld [vmem:[%s905 + $0x48] sm:$0xff]
    %v916 = vld [vmem:[%s905 + $0x50] sm:$0xff]
    %v917 = vld [vmem:[%s905 + $0x58] sm:$0xff]
    %v918 = vld [vmem:[%s905 + $0x60] sm:$0xff]
    %v919 = vld [vmem:[%s905 + $0x68] sm:$0xff]
    %v920 = vld [vmem:[%s905 + $0x70] sm:$0xff]
    %v921 = vld [vmem:[%s905 + $0x78] sm:$0xff]
    %922 = vmatpush.msra.mxu0 %v921
    %923 = vmatpush.msra.mxu0 %v920
    %924 = vmatpush.msra.mxu0 %v919
    %925 = vmatpush.msra.mxu0 %v918
    %926 = vmatpush.msra.mxu0 %v917
    %927 = vmatpush.msra.mxu0 %v916
    %928 = vmatpush.msra.mxu0 %v915
    %929 = vmatpush.msra.mxu0 %v914
    %930 = vmatpush.msra.mxu0 %v913
    %931 = vmatpush.msra.mxu0 %v912
    %932 = vmatpush.msra.mxu0 %v911
    %933 = vmatpush.msra.mxu0 %v910
    %934 = vmatpush.msra.mxu0 %v909
    %935 = vmatpush.msra.mxu0 %v908
    %936 = vmatpush.msra.mxu0 %v907
    %937 = vmatpush.msra.mxu0 %v906
    %938 = vmatmul.f32.gmra.mxu0 %v894
    %v939 = vpop.f32.mrf.mxu0
    %v940 = vadd.f32 0.0, %v939
    %941 = vmatmul.f32.gmra.mxu0 %v897
    %v942 = vpop.f32.mrf.mxu0
    %v943 = vadd.f32 0.0, %v942
    %944 = vmatmul.f32.gmra.mxu0 %v900
    %v945 = vpop.f32.mrf.mxu0
    %v946 = vadd.f32 0.0, %v945
    %947 = vmatmul.f32.gmra.mxu0 %v903
    %v948 = vpop.f32.mrf.mxu0
    %v949 = vadd.f32 0.0, %v948
    %950 = vdwg.mxu0
    %v951 = vadd.f32 %v867, %v940
    %v952 = vadd.f32 %v868, %v943
    %v953 = vadd.f32 %v869, %v946
    %v954 = vadd.f32 %v870, %v949
    %s955 = scalar_lea.vmem %s3, 320
    %v956 = vld [vmem:[%s955] sm:$0xff]
    %v957 = vld [vmem:[%s955 + $0x8] sm:$0xff]
    %v958 = vld [vmem:[%s955 + $0x10] sm:$0xff]
    %v959 = vld [vmem:[%s955 + $0x18] sm:$0xff]
    %960 = vmatpush.msra.mxu0 %v123
    %961 = vmatpush.msra.mxu0 %v120
    %962 = vmatpush.msra.mxu0 %v117
    %963 = vmatpush.msra.mxu0 %v114
    %964 = vmatpush.msra.mxu0 %v111
    %965 = vmatpush.msra.mxu0 %v108
    %966 = vmatpush.msra.mxu0 %v105
    %967 = vmatpush.msra.mxu0 %v102
    %968 = vmatpush.msra.mxu0 %v99
    %969 = vmatpush.msra.mxu0 %v96
    %970 = vmatpush.msra.mxu0 %v93
    %971 = vmatpush.msra.mxu0 %v90
    %972 = vmatpush.msra.mxu0 %v87
    %973 = vmatpush.msra.mxu0 %v84
    %974 = vmatpush.msra.mxu0 %v81
    %975 = vmatpush.msra.mxu0 %v78
    %976 = vmatmul.f32.gmra.mxu0 %v956
    %v977 = vpop.f32.mrf.mxu0
    %v978 = vadd.f32 0.0, %v977
    %979 = vmatmul.f32.gmra.mxu0 %v957
    %v980 = vpop.f32.mrf.mxu0
    %v981 = vadd.f32 0.0, %v980
    %982 = vmatmul.f32.gmra.mxu0 %v958
    %v983 = vpop.f32.mrf.mxu0
    %v984 = vadd.f32 0.0, %v983
    %985 = vmatmul.f32.gmra.mxu0 %v959
    %v986 = vpop.f32.mrf.mxu0
    %v987 = vadd.f32 0.0, %v986
    %988 = vdwg.mxu0
    %s989 = scalar_lea.vmem %s4, 1280
    %v990 = vld [vmem:[%s989] sm:$0xff]
    %v991 = vld [vmem:[%s989 + $0x8] sm:$0xff]
    %v992 = vld [vmem:[%s989 + $0x10] sm:$0xff]
    %v993 = vld [vmem:[%s989 + $0x18] sm:$0xff]
    %v994 = vld [vmem:[%s989 + $0x20] sm:$0xff]
    %v995 = vld [vmem:[%s989 + $0x28] sm:$0xff]
    %v996 = vld [vmem:[%s989 + $0x30] sm:$0xff]
    %v997 = vld [vmem:[%s989 + $0x38] sm:$0xff]
    %v998 = vld [vmem:[%s989 + $0x40] sm:$0xff]
    %v999 = vld [vmem:[%s989 + $0x48] sm:$0xff]
    %v1000 = vld [vmem:[%s989 + $0x50] sm:$0xff]
    %v1001 = vld [vmem:[%s989 + $0x58] sm:$0xff]
    %v1002 = vld [vmem:[%s989 + $0x60] sm:$0xff]
    %v1003 = vld [vmem:[%s989 + $0x68] sm:$0xff]
    %v1004 = vld [vmem:[%s989 + $0x70] sm:$0xff]
    %v1005 = vld [vmem:[%s989 + $0x78] sm:$0xff]
    %1006 = vmatpush.msra.mxu0 %v1005
    %1007 = vmatpush.msra.mxu0 %v1004
    %1008 = vmatpush.msra.mxu0 %v1003
    %1009 = vmatpush.msra.mxu0 %v1002
    %1010 = vmatpush.msra.mxu0 %v1001
    %1011 = vmatpush.msra.mxu0 %v1000
    %1012 = vmatpush.msra.mxu0 %v999
    %1013 = vmatpush.msra.mxu0 %v998
    %1014 = vmatpush.msra.mxu0 %v997
    %1015 = vmatpush.msra.mxu0 %v996
    %1016 = vmatpush.msra.mxu0 %v995
    %1017 = vmatpush.msra.mxu0 %v994
    %1018 = vmatpush.msra.mxu0 %v993
    %1019 = vmatpush.msra.mxu0 %v992
    %1020 = vmatpush.msra.mxu0 %v991
    %1021 = vmatpush.msra.mxu0 %v990
    %1022 = vmatmul.f32.gmra.mxu0 %v978
    %v1023 = vpop.f32.mrf.mxu0
    %v1024 = vadd.f32 0.0, %v1023
    %1025 = vmatmul.f32.gmra.mxu0 %v981
    %v1026 = vpop.f32.mrf.mxu0
    %v1027 = vadd.f32 0.0, %v1026
    %1028 = vmatmul.f32.gmra.mxu0 %v984
    %v1029 = vpop.f32.mrf.mxu0
    %v1030 = vadd.f32 0.0, %v1029
    %1031 = vmatmul.f32.gmra.mxu0 %v987
    %v1032 = vpop.f32.mrf.mxu0
    %v1033 = vadd.f32 0.0, %v1032
    %1034 = vdwg.mxu0
    %v1035 = vadd.f32 %v951, %v1024
    %v1036 = vadd.f32 %v952, %v1027
    %v1037 = vadd.f32 %v953, %v1030
    %v1038 = vadd.f32 %v954, %v1033
    %s1039 = scalar_lea.vmem %s3, 352
    %v1040 = vld [vmem:[%s1039] sm:$0xff]
    %v1041 = vld [vmem:[%s1039 + $0x8] sm:$0xff]
    %v1042 = vld [vmem:[%s1039 + $0x10] sm:$0xff]
    %v1043 = vld [vmem:[%s1039 + $0x18] sm:$0xff]
    %1044 = vmatpush.msra.mxu0 %v123
    %1045 = vmatpush.msra.mxu0 %v120
    %1046 = vmatpush.msra.mxu0 %v117
    %1047 = vmatpush.msra.mxu0 %v114
    %1048 = vmatpush.msra.mxu0 %v111
    %1049 = vmatpush.msra.mxu0 %v108
    %1050 = vmatpush.msra.mxu0 %v105
    %1051 = vmatpush.msra.mxu0 %v102
    %1052 = vmatpush.msra.mxu0 %v99
    %1053 = vmatpush.msra.mxu0 %v96
    %1054 = vmatpush.msra.mxu0 %v93
    %1055 = vmatpush.msra.mxu0 %v90
    %1056 = vmatpush.msra.mxu0 %v87
    %1057 = vmatpush.msra.mxu0 %v84
    %1058 = vmatpush.msra.mxu0 %v81
    %1059 = vmatpush.msra.mxu0 %v78
    %1060 = vmatmul.f32.gmra.mxu0 %v1040
    %v1061 = vpop.f32.mrf.mxu0
    %v1062 = vadd.f32 0.0, %v1061
    %1063 = vmatmul.f32.gmra.mxu0 %v1041
    %v1064 = vpop.f32.mrf.mxu0
    %v1065 = vadd.f32 0.0, %v1064
    %1066 = vmatmul.f32.gmra.mxu0 %v1042
    %v1067 = vpop.f32.mrf.mxu0
    %v1068 = vadd.f32 0.0, %v1067
    %1069 = vmatmul.f32.gmra.mxu0 %v1043
    %v1070 = vpop.f32.mrf.mxu0
    %v1071 = vadd.f32 0.0, %v1070
    %1072 = vdwg.mxu0
    %s1073 = scalar_lea.vmem %s4, 1408
    %v1074 = vld [vmem:[%s1073] sm:$0xff]
    %v1075 = vld [vmem:[%s1073 + $0x8] sm:$0xff]
    %v1076 = vld [vmem:[%s1073 + $0x10] sm:$0xff]
    %v1077 = vld [vmem:[%s1073 + $0x18] sm:$0xff]
    %v1078 = vld [vmem:[%s1073 + $0x20] sm:$0xff]
    %v1079 = vld [vmem:[%s1073 + $0x28] sm:$0xff]
    %v1080 = vld [vmem:[%s1073 + $0x30] sm:$0xff]
    %v1081 = vld [vmem:[%s1073 + $0x38] sm:$0xff]
    %v1082 = vld [vmem:[%s1073 + $0x40] sm:$0xff]
    %v1083 = vld [vmem:[%s1073 + $0x48] sm:$0xff]
    %v1084 = vld [vmem:[%s1073 + $0x50] sm:$0xff]
    %v1085 = vld [vmem:[%s1073 + $0x58] sm:$0xff]
    %v1086 = vld [vmem:[%s1073 + $0x60] sm:$0xff]
    %v1087 = vld [vmem:[%s1073 + $0x68] sm:$0xff]
    %v1088 = vld [vmem:[%s1073 + $0x70] sm:$0xff]
    %v1089 = vld [vmem:[%s1073 + $0x78] sm:$0xff]
    %1090 = vmatpush.msra.mxu0 %v1089
    %1091 = vmatpush.msra.mxu0 %v1088
    %1092 = vmatpush.msra.mxu0 %v1087
    %1093 = vmatpush.msra.mxu0 %v1086
    %1094 = vmatpush.msra.mxu0 %v1085
    %1095 = vmatpush.msra.mxu0 %v1084
    %1096 = vmatpush.msra.mxu0 %v1083
    %1097 = vmatpush.msra.mxu0 %v1082
    %1098 = vmatpush.msra.mxu0 %v1081
    %1099 = vmatpush.msra.mxu0 %v1080
    %1100 = vmatpush.msra.mxu0 %v1079
    %1101 = vmatpush.msra.mxu0 %v1078
    %1102 = vmatpush.msra.mxu0 %v1077
    %1103 = vmatpush.msra.mxu0 %v1076
    %1104 = vmatpush.msra.mxu0 %v1075
    %1105 = vmatpush.msra.mxu0 %v1074
    %1106 = vmatmul.f32.gmra.mxu0 %v1062
    %v1107 = vpop.f32.mrf.mxu0
    %v1108 = vadd.f32 0.0, %v1107
    %1109 = vmatmul.f32.gmra.mxu0 %v1065
    %v1110 = vpop.f32.mrf.mxu0
    %v1111 = vadd.f32 0.0, %v1110
    %1112 = vmatmul.f32.gmra.mxu0 %v1068
    %v1113 = vpop.f32.mrf.mxu0
    %v1114 = vadd.f32 0.0, %v1113
    %1115 = vmatmul.f32.gmra.mxu0 %v1071
    %v1116 = vpop.f32.mrf.mxu0
    %v1117 = vadd.f32 0.0, %v1116
    %1118 = vdwg.mxu0
    %v1119 = vadd.f32 %v1035, %v1108
    %v1120 = vadd.f32 %v1036, %v1111
    %v1121 = vadd.f32 %v1037, %v1114
    %v1122 = vadd.f32 %v1038, %v1117
    %s1123 = scalar_lea.vmem %s3, 384
    %v1124 = vld [vmem:[%s1123] sm:$0xff]
    %v1125 = vld [vmem:[%s1123 + $0x8] sm:$0xff]
    %v1126 = vld [vmem:[%s1123 + $0x10] sm:$0xff]
    %v1127 = vld [vmem:[%s1123 + $0x18] sm:$0xff]
    %1128 = vmatpush.msra.mxu0 %v123
    %1129 = vmatpush.msra.mxu0 %v120
    %1130 = vmatpush.msra.mxu0 %v117
    %1131 = vmatpush.msra.mxu0 %v114
    %1132 = vmatpush.msra.mxu0 %v111
    %1133 = vmatpush.msra.mxu0 %v108
    %1134 = vmatpush.msra.mxu0 %v105
    %1135 = vmatpush.msra.mxu0 %v102
    %1136 = vmatpush.msra.mxu0 %v99
    %1137 = vmatpush.msra.mxu0 %v96
    %1138 = vmatpush.msra.mxu0 %v93
    %1139 = vmatpush.msra.mxu0 %v90
    %1140 = vmatpush.msra.mxu0 %v87
    %1141 = vmatpush.msra.mxu0 %v84
    %1142 = vmatpush.msra.mxu0 %v81
    %1143 = vmatpush.msra.mxu0 %v78
    %1144 = vmatmul.f32.gmra.mxu0 %v1124
    %v1145 = vpop.f32.mrf.mxu0
    %v1146 = vadd.f32 0.0, %v1145
    %1147 = vmatmul.f32.gmra.mxu0 %v1125
    %v1148 = vpop.f32.mrf.mxu0
    %v1149 = vadd.f32 0.0, %v1148
    %1150 = vmatmul.f32.gmra.mxu0 %v1126
    %v1151 = vpop.f32.mrf.mxu0
    %v1152 = vadd.f32 0.0, %v1151
    %1153 = vmatmul.f32.gmra.mxu0 %v1127
    %v1154 = vpop.f32.mrf.mxu0
    %v1155 = vadd.f32 0.0, %v1154
    %1156 = vdwg.mxu0
    %s1157 = scalar_lea.vmem %s4, 1536
    %v1158 = vld [vmem:[%s1157] sm:$0xff]
    %v1159 = vld [vmem:[%s1157 + $0x8] sm:$0xff]
    %v1160 = vld [vmem:[%s1157 + $0x10] sm:$0xff]
    %v1161 = vld [vmem:[%s1157 + $0x18] sm:$0xff]
    %v1162 = vld [vmem:[%s1157 + $0x20] sm:$0xff]
    %v1163 = vld [vmem:[%s1157 + $0x28] sm:$0xff]
    %v1164 = vld [vmem:[%s1157 + $0x30] sm:$0xff]
    %v1165 = vld [vmem:[%s1157 + $0x38] sm:$0xff]
    %v1166 = vld [vmem:[%s1157 + $0x40] sm:$0xff]
    %v1167 = vld [vmem:[%s1157 + $0x48] sm:$0xff]
    %v1168 = vld [vmem:[%s1157 + $0x50] sm:$0xff]
    %v1169 = vld [vmem:[%s1157 + $0x58] sm:$0xff]
    %v1170 = vld [vmem:[%s1157 + $0x60] sm:$0xff]
    %v1171 = vld [vmem:[%s1157 + $0x68] sm:$0xff]
    %v1172 = vld [vmem:[%s1157 + $0x70] sm:$0xff]
    %v1173 = vld [vmem:[%s1157 + $0x78] sm:$0xff]
    %1174 = vmatpush.msra.mxu0 %v1173
    %1175 = vmatpush.msra.mxu0 %v1172
    %1176 = vmatpush.msra.mxu0 %v1171
    %1177 = vmatpush.msra.mxu0 %v1170
    %1178 = vmatpush.msra.mxu0 %v1169
    %1179 = vmatpush.msra.mxu0 %v1168
    %1180 = vmatpush.msra.mxu0 %v1167
    %1181 = vmatpush.msra.mxu0 %v1166
    %1182 = vmatpush.msra.mxu0 %v1165
    %1183 = vmatpush.msra.mxu0 %v1164
    %1184 = vmatpush.msra.mxu0 %v1163
    %1185 = vmatpush.msra.mxu0 %v1162
    %1186 = vmatpush.msra.mxu0 %v1161
    %1187 = vmatpush.msra.mxu0 %v1160
    %1188 = vmatpush.msra.mxu0 %v1159
    %1189 = vmatpush.msra.mxu0 %v1158
    %1190 = vmatmul.f32.gmra.mxu0 %v1146
    %v1191 = vpop.f32.mrf.mxu0
    %v1192 = vadd.f32 0.0, %v1191
    %1193 = vmatmul.f32.gmra.mxu0 %v1149
    %v1194 = vpop.f32.mrf.mxu0
    %v1195 = vadd.f32 0.0, %v1194
    %1196 = vmatmul.f32.gmra.mxu0 %v1152
    %v1197 = vpop.f32.mrf.mxu0
    %v1198 = vadd.f32 0.0, %v1197
    %1199 = vmatmul.f32.gmra.mxu0 %v1155
    %v1200 = vpop.f32.mrf.mxu0
    %v1201 = vadd.f32 0.0, %v1200
    %1202 = vdwg.mxu0
    %v1203 = vadd.f32 %v1119, %v1192
    %v1204 = vadd.f32 %v1120, %v1195
    %v1205 = vadd.f32 %v1121, %v1198
    %v1206 = vadd.f32 %v1122, %v1201
    %s1207 = scalar_lea.vmem %s3, 416
    %v1208 = vld [vmem:[%s1207] sm:$0xff]
    %v1209 = vld [vmem:[%s1207 + $0x8] sm:$0xff]
    %v1210 = vld [vmem:[%s1207 + $0x10] sm:$0xff]
    %v1211 = vld [vmem:[%s1207 + $0x18] sm:$0xff]
    %1212 = vmatpush.msra.mxu0 %v123
    %1213 = vmatpush.msra.mxu0 %v120
    %1214 = vmatpush.msra.mxu0 %v117
    %1215 = vmatpush.msra.mxu0 %v114
    %1216 = vmatpush.msra.mxu0 %v111
    %1217 = vmatpush.msra.mxu0 %v108
    %1218 = vmatpush.msra.mxu0 %v105
    %1219 = vmatpush.msra.mxu0 %v102
    %1220 = vmatpush.msra.mxu0 %v99
    %1221 = vmatpush.msra.mxu0 %v96
    %1222 = vmatpush.msra.mxu0 %v93
    %1223 = vmatpush.msra.mxu0 %v90
    %1224 = vmatpush.msra.mxu0 %v87
    %1225 = vmatpush.msra.mxu0 %v84
    %1226 = vmatpush.msra.mxu0 %v81
    %1227 = vmatpush.msra.mxu0 %v78
    %1228 = vmatmul.f32.gmra.mxu0 %v1208
    %v1229 = vpop.f32.mrf.mxu0
    %v1230 = vadd.f32 0.0, %v1229
    %1231 = vmatmul.f32.gmra.mxu0 %v1209
    %v1232 = vpop.f32.mrf.mxu0
    %v1233 = vadd.f32 0.0, %v1232
    %1234 = vmatmul.f32.gmra.mxu0 %v1210
    %v1235 = vpop.f32.mrf.mxu0
    %v1236 = vadd.f32 0.0, %v1235
    %1237 = vmatmul.f32.gmra.mxu0 %v1211
    %v1238 = vpop.f32.mrf.mxu0
    %v1239 = vadd.f32 0.0, %v1238
    %1240 = vdwg.mxu0
    %s1241 = scalar_lea.vmem %s4, 1664
    %v1242 = vld [vmem:[%s1241] sm:$0xff]
    %v1243 = vld [vmem:[%s1241 + $0x8] sm:$0xff]
    %v1244 = vld [vmem:[%s1241 + $0x10] sm:$0xff]
    %v1245 = vld [vmem:[%s1241 + $0x18] sm:$0xff]
    %v1246 = vld [vmem:[%s1241 + $0x20] sm:$0xff]
    %v1247 = vld [vmem:[%s1241 + $0x28] sm:$0xff]
    %v1248 = vld [vmem:[%s1241 + $0x30] sm:$0xff]
    %v1249 = vld [vmem:[%s1241 + $0x38] sm:$0xff]
    %v1250 = vld [vmem:[%s1241 + $0x40] sm:$0xff]
    %v1251 = vld [vmem:[%s1241 + $0x48] sm:$0xff]
    %v1252 = vld [vmem:[%s1241 + $0x50] sm:$0xff]
    %v1253 = vld [vmem:[%s1241 + $0x58] sm:$0xff]
    %v1254 = vld [vmem:[%s1241 + $0x60] sm:$0xff]
    %v1255 = vld [vmem:[%s1241 + $0x68] sm:$0xff]
    %v1256 = vld [vmem:[%s1241 + $0x70] sm:$0xff]
    %v1257 = vld [vmem:[%s1241 + $0x78] sm:$0xff]
    %1258 = vmatpush.msra.mxu0 %v1257
    %1259 = vmatpush.msra.mxu0 %v1256
    %1260 = vmatpush.msra.mxu0 %v1255
    %1261 = vmatpush.msra.mxu0 %v1254
    %1262 = vmatpush.msra.mxu0 %v1253
    %1263 = vmatpush.msra.mxu0 %v1252
    %1264 = vmatpush.msra.mxu0 %v1251
    %1265 = vmatpush.msra.mxu0 %v1250
    %1266 = vmatpush.msra.mxu0 %v1249
    %1267 = vmatpush.msra.mxu0 %v1248
    %1268 = vmatpush.msra.mxu0 %v1247
    %1269 = vmatpush.msra.mxu0 %v1246
    %1270 = vmatpush.msra.mxu0 %v1245
    %1271 = vmatpush.msra.mxu0 %v1244
    %1272 = vmatpush.msra.mxu0 %v1243
    %1273 = vmatpush.msra.mxu0 %v1242
    %1274 = vmatmul.f32.gmra.mxu0 %v1230
    %v1275 = vpop.f32.mrf.mxu0
    %v1276 = vadd.f32 0.0, %v1275
    %1277 = vmatmul.f32.gmra.mxu0 %v1233
    %v1278 = vpop.f32.mrf.mxu0
    %v1279 = vadd.f32 0.0, %v1278
    %1280 = vmatmul.f32.gmra.mxu0 %v1236
    %v1281 = vpop.f32.mrf.mxu0
    %v1282 = vadd.f32 0.0, %v1281
    %1283 = vmatmul.f32.gmra.mxu0 %v1239
    %v1284 = vpop.f32.mrf.mxu0
    %v1285 = vadd.f32 0.0, %v1284
    %1286 = vdwg.mxu0
    %v1287 = vadd.f32 %v1203, %v1276
    %v1288 = vadd.f32 %v1204, %v1279
    %v1289 = vadd.f32 %v1205, %v1282
    %v1290 = vadd.f32 %v1206, %v1285
    %s1291 = scalar_lea.vmem %s3, 448
    %v1292 = vld [vmem:[%s1291] sm:$0xff]
    %v1293 = vld [vmem:[%s1291 + $0x8] sm:$0xff]
    %v1294 = vld [vmem:[%s1291 + $0x10] sm:$0xff]
    %v1295 = vld [vmem:[%s1291 + $0x18] sm:$0xff]
    %1296 = vmatpush.msra.mxu0 %v123
    %1297 = vmatpush.msra.mxu0 %v120
    %1298 = vmatpush.msra.mxu0 %v117
    %1299 = vmatpush.msra.mxu0 %v114
    %1300 = vmatpush.msra.mxu0 %v111
    %1301 = vmatpush.msra.mxu0 %v108
    %1302 = vmatpush.msra.mxu0 %v105
    %1303 = vmatpush.msra.mxu0 %v102
    %1304 = vmatpush.msra.mxu0 %v99
    %1305 = vmatpush.msra.mxu0 %v96
    %1306 = vmatpush.msra.mxu0 %v93
    %1307 = vmatpush.msra.mxu0 %v90
    %1308 = vmatpush.msra.mxu0 %v87
    %1309 = vmatpush.msra.mxu0 %v84
    %1310 = vmatpush.msra.mxu0 %v81
    %1311 = vmatpush.msra.mxu0 %v78
    %1312 = vmatmul.f32.gmra.mxu0 %v1292
    %v1313 = vpop.f32.mrf.mxu0
    %v1314 = vadd.f32 0.0, %v1313
    %1315 = vmatmul.f32.gmra.mxu0 %v1293
    %v1316 = vpop.f32.mrf.mxu0
    %v1317 = vadd.f32 0.0, %v1316
    %1318 = vmatmul.f32.gmra.mxu0 %v1294
    %v1319 = vpop.f32.mrf.mxu0
    %v1320 = vadd.f32 0.0, %v1319
    %1321 = vmatmul.f32.gmra.mxu0 %v1295
    %v1322 = vpop.f32.mrf.mxu0
    %v1323 = vadd.f32 0.0, %v1322
    %1324 = vdwg.mxu0
    %s1325 = scalar_lea.vmem %s4, 1792
    %v1326 = vld [vmem:[%s1325] sm:$0xff]
    %v1327 = vld [vmem:[%s1325 + $0x8] sm:$0xff]
    %v1328 = vld [vmem:[%s1325 + $0x10] sm:$0xff]
    %v1329 = vld [vmem:[%s1325 + $0x18] sm:$0xff]
    %v1330 = vld [vmem:[%s1325 + $0x20] sm:$0xff]
    %v1331 = vld [vmem:[%s1325 + $0x28] sm:$0xff]
    %v1332 = vld [vmem:[%s1325 + $0x30] sm:$0xff]
    %v1333 = vld [vmem:[%s1325 + $0x38] sm:$0xff]
    %v1334 = vld [vmem:[%s1325 + $0x40] sm:$0xff]
    %v1335 = vld [vmem:[%s1325 + $0x48] sm:$0xff]
    %v1336 = vld [vmem:[%s1325 + $0x50] sm:$0xff]
    %v1337 = vld [vmem:[%s1325 + $0x58] sm:$0xff]
    %v1338 = vld [vmem:[%s1325 + $0x60] sm:$0xff]
    %v1339 = vld [vmem:[%s1325 + $0x68] sm:$0xff]
    %v1340 = vld [vmem:[%s1325 + $0x70] sm:$0xff]
    %v1341 = vld [vmem:[%s1325 + $0x78] sm:$0xff]
    %1342 = vmatpush.msra.mxu0 %v1341
    %1343 = vmatpush.msra.mxu0 %v1340
    %1344 = vmatpush.msra.mxu0 %v1339
    %1345 = vmatpush.msra.mxu0 %v1338
    %1346 = vmatpush.msra.mxu0 %v1337
    %1347 = vmatpush.msra.mxu0 %v1336
    %1348 = vmatpush.msra.mxu0 %v1335
    %1349 = vmatpush.msra.mxu0 %v1334
    %1350 = vmatpush.msra.mxu0 %v1333
    %1351 = vmatpush.msra.mxu0 %v1332
    %1352 = vmatpush.msra.mxu0 %v1331
    %1353 = vmatpush.msra.mxu0 %v1330
    %1354 = vmatpush.msra.mxu0 %v1329
    %1355 = vmatpush.msra.mxu0 %v1328
    %1356 = vmatpush.msra.mxu0 %v1327
    %1357 = vmatpush.msra.mxu0 %v1326
    %1358 = vmatmul.f32.gmra.mxu0 %v1314
    %v1359 = vpop.f32.mrf.mxu0
    %v1360 = vadd.f32 0.0, %v1359
    %1361 = vmatmul.f32.gmra.mxu0 %v1317
    %v1362 = vpop.f32.mrf.mxu0
    %v1363 = vadd.f32 0.0, %v1362
    %1364 = vmatmul.f32.gmra.mxu0 %v1320
    %v1365 = vpop.f32.mrf.mxu0
    %v1366 = vadd.f32 0.0, %v1365
    %1367 = vmatmul.f32.gmra.mxu0 %v1323
    %v1368 = vpop.f32.mrf.mxu0
    %v1369 = vadd.f32 0.0, %v1368
    %1370 = vdwg.mxu0
    %v1371 = vadd.f32 %v1287, %v1360
    %v1372 = vadd.f32 %v1288, %v1363
    %v1373 = vadd.f32 %v1289, %v1366
    %v1374 = vadd.f32 %v1290, %v1369
    %s1375 = scalar_lea.vmem %s3, 480
    %v1376 = vld [vmem:[%s1375] sm:$0xff]
    %v1377 = vld [vmem:[%s1375 + $0x8] sm:$0xff]
    %v1378 = vld [vmem:[%s1375 + $0x10] sm:$0xff]
    %v1379 = vld [vmem:[%s1375 + $0x18] sm:$0xff]
    %1380 = vmatpush.msra.mxu0 %v123
    %1381 = vmatpush.msra.mxu0 %v120
    %1382 = vmatpush.msra.mxu0 %v117
    %1383 = vmatpush.msra.mxu0 %v114
    %1384 = vmatpush.msra.mxu0 %v111
    %1385 = vmatpush.msra.mxu0 %v108
    %1386 = vmatpush.msra.mxu0 %v105
    %1387 = vmatpush.msra.mxu0 %v102
    %1388 = vmatpush.msra.mxu0 %v99
    %1389 = vmatpush.msra.mxu0 %v96
    %1390 = vmatpush.msra.mxu0 %v93
    %1391 = vmatpush.msra.mxu0 %v90
    %1392 = vmatpush.msra.mxu0 %v87
    %1393 = vmatpush.msra.mxu0 %v84
    %1394 = vmatpush.msra.mxu0 %v81
    %1395 = vmatpush.msra.mxu0 %v78
    %1396 = vmatmul.f32.gmra.mxu0 %v1376
    %v1397 = vpop.f32.mrf.mxu0
    %v1398 = vadd.f32 0.0, %v1397
    %1399 = vmatmul.f32.gmra.mxu0 %v1377
    %v1400 = vpop.f32.mrf.mxu0
    %v1401 = vadd.f32 0.0, %v1400
    %1402 = vmatmul.f32.gmra.mxu0 %v1378
    %v1403 = vpop.f32.mrf.mxu0
    %v1404 = vadd.f32 0.0, %v1403
    %1405 = vmatmul.f32.gmra.mxu0 %v1379
    %v1406 = vpop.f32.mrf.mxu0
    %v1407 = vadd.f32 0.0, %v1406
    %1408 = vdwg.mxu0
    %s1409 = scalar_lea.vmem %s4, 1920
    %v1410 = vld [vmem:[%s1409] sm:$0xff]
    %v1411 = vld [vmem:[%s1409 + $0x8] sm:$0xff]
    %v1412 = vld [vmem:[%s1409 + $0x10] sm:$0xff]
    %v1413 = vld [vmem:[%s1409 + $0x18] sm:$0xff]
    %v1414 = vld [vmem:[%s1409 + $0x20] sm:$0xff]
    %v1415 = vld [vmem:[%s1409 + $0x28] sm:$0xff]
    %v1416 = vld [vmem:[%s1409 + $0x30] sm:$0xff]
    %v1417 = vld [vmem:[%s1409 + $0x38] sm:$0xff]
    %v1418 = vld [vmem:[%s1409 + $0x40] sm:$0xff]
    %v1419 = vld [vmem:[%s1409 + $0x48] sm:$0xff]
    %v1420 = vld [vmem:[%s1409 + $0x50] sm:$0xff]
    %v1421 = vld [vmem:[%s1409 + $0x58] sm:$0xff]
    %v1422 = vld [vmem:[%s1409 + $0x60] sm:$0xff]
    %v1423 = vld [vmem:[%s1409 + $0x68] sm:$0xff]
    %v1424 = vld [vmem:[%s1409 + $0x70] sm:$0xff]
    %v1425 = vld [vmem:[%s1409 + $0x78] sm:$0xff]
    %1426 = vmatpush.msra.mxu0 %v1425
    %1427 = vmatpush.msra.mxu0 %v1424
    %1428 = vmatpush.msra.mxu0 %v1423
    %1429 = vmatpush.msra.mxu0 %v1422
    %1430 = vmatpush.msra.mxu0 %v1421
    %1431 = vmatpush.msra.mxu0 %v1420
    %1432 = vmatpush.msra.mxu0 %v1419
    %1433 = vmatpush.msra.mxu0 %v1418
    %1434 = vmatpush.msra.mxu0 %v1417
    %1435 = vmatpush.msra.mxu0 %v1416
    %1436 = vmatpush.msra.mxu0 %v1415
    %1437 = vmatpush.msra.mxu0 %v1414
    %1438 = vmatpush.msra.mxu0 %v1413
    %1439 = vmatpush.msra.mxu0 %v1412
    %1440 = vmatpush.msra.mxu0 %v1411
    %1441 = vmatpush.msra.mxu0 %v1410
    %1442 = vmatmul.f32.gmra.mxu0 %v1398
    %v1443 = vpop.f32.mrf.mxu0
    %v1444 = vadd.f32 0.0, %v1443
    %1445 = vmatmul.f32.gmra.mxu0 %v1401
    %v1446 = vpop.f32.mrf.mxu0
    %v1447 = vadd.f32 0.0, %v1446
    %1448 = vmatmul.f32.gmra.mxu0 %v1404
    %v1449 = vpop.f32.mrf.mxu0
    %v1450 = vadd.f32 0.0, %v1449
    %1451 = vmatmul.f32.gmra.mxu0 %v1407
    %v1452 = vpop.f32.mrf.mxu0
    %v1453 = vadd.f32 0.0, %v1452
    %1454 = vdwg.mxu0
    %v1455 = vadd.f32 %v1371, %v1444
    %v1456 = vadd.f32 %v1372, %v1447
    %v1457 = vadd.f32 %v1373, %v1450
    %v1458 = vadd.f32 %v1374, %v1453
    %v1459 = vld [vmem:[%s5] sm:$0x1]
    %v1461 = vperm.slane %v1459, 0
    %v1463 = vadd.f32 %v1455, %v1461
    %v1464 = vadd.f32 %v1456, %v1461
    %v1465 = vadd.f32 %v1457, %v1461
    %v1466 = vadd.f32 %v1458, %v1461
    %1467 = vst [vmem:[#allocation2] sm:$0xff] %v1463
    %1468 = vst [vmem:[#allocation2 + $0x8] sm:$0xff] %v1464
    %1469 = vst [vmem:[#allocation2 + $0x10] sm:$0xff] %v1465
    %1470 = vst [vmem:[#allocation2 + $0x18] sm:$0xff] %v1466
    // Predicated region
    $region26: #{forward.1} parent=1 // pred_check
      _
    $region27: #{forward.1} parent=1 // pred_check_branch
      %1472 = sbr.rel (0) target = $region29
    $region28: #{forward.1} parent=1 // pred_region
      %1474 = vsyncadd [#allocation3], 0
      %s1475 = sshll.u32 [#allocation2], 4
      %s1476 = int_to_ptr.vmem [resolvable:$true] %s1475
      %s1477 = sshll.u32 %s6, 4
      %s1478 = int_to_ptr.hbm [resolvable:$true] %s1477
      %1483 = dma.vmem_to_hbm [thread:$0]  %s1476, 512, %s1478, [#allocation3], 128, 128, 8
    $region29: #{forward.1} parent=1 // pred_fallthru
      _
    // Predicated region
    $region30: #{forward.1} parent=1 // pred_check
      _
    $region31: #{forward.1} parent=1 // pred_check_branch
      %1485 = sbr.rel (0) target = $region33
    $region32: #{forward.1} parent=1 // pred_region
      %1487 = dma.done [#allocation3], 512
    $region33: #{forward.1} parent=1 // pred_fallthru
      _
    %1488 = vsyncpa [#allocation3], 1

</llo_original>
